<compile_context>
chip_gen: v7x
topology: tpu7x:2x2x1
jax: 0.10.0
libtpu: 0.0.40
codegen_flags: <defaults>
</compile_context>

<pallas_src>
import jax
import jax.numpy as jnp
from jax.experimental import pallas as pl
from jax.experimental.pallas import tpu as pltpu

LEAKY_SLOPE = 0.2
BN_EPS = 1e-5

# Model dimensions (consistent with the module's constructor).
A_DIM, B_DIM, C_DIM = 100, 80, 60
DIM_1A = DIM_1B = DIM_1C = 128
DIM_TOTAL = DIM_1A + DIM_1B + DIM_1C          # 384
LATENT_DIM = 64
IN_TOTAL = B_DIM + A_DIM + C_DIM              # 240 used (packed input: B|A|C)
IN_PAD = 256                                  # padded to 2x128 lanes
RECON_TOTAL = B_DIM + A_DIM + C_DIM           # 240 used (packed recon: B|A|C)
RECON_PAD = 256                               # padded to 2x128 lanes
BATCH = 4

# Packed output-slab column offsets — every seam 128-lane aligned.
Z_OFF = 0                                     # z  [0:64]   (64:128 unused)
MEAN_OFF = 128                                # mean    [128:192]
LV_OFF = 192                                  # log_var [192:256]
RB_OFF = 256                                  # recon_B [256:336]
RA_OFF = RB_OFF + B_DIM                       # recon_A [336:436]
RC_OFF = RA_OFF + A_DIM                       # recon_C [436:496]
OUT_SLAB = 512                                # 4x128 lanes


# --------------------------------------------------------------------------
# Host-side parameter packing
# --------------------------------------------------------------------------
def pack_params(raw_params):
    """Pack the 26 raw parameters into 4 bf16 weight slabs + 1 f32 vector slab.

    Biases of the 4 Linear layers that feed BatchNorm (b1a, b1b, b1c, bz) are
    dropped: TRAINING-mode BN subtracts the batch mean, which cancels any
    constant bias exactly.  (Not valid for eval-mode / running-stats BN.)
    """
    (w1a, _b1a, g1a, be1a,
     w1b, _b1b, g1b, be1b,
     w1c, _b1c, g1c, be1c,
     wmean, bmean, wlv, blv,
     wz, _bz, gz, bez,
     w4b, b4b, w4a, b4a, w4c, b4c) = raw_params

    # Encoder block-diagonal weight: input [N,256]=(B|A|C|pad) -> [N,384]=(B|A|C).
    w_enc = jnp.zeros((IN_PAD, DIM_TOTAL), jnp.float32)
    w_enc = w_enc.at[0:B_DIM, 0:DIM_1B].set(w1b)
    w_enc = w_enc.at[B_DIM:B_DIM + A_DIM, DIM_1B:DIM_1B + DIM_1A].set(w1a)
    w_enc = w_enc.at[B_DIM + A_DIM:IN_TOTAL, DIM_1B + DIM_1A:].set(w1c)

    # Fused latent heads: [384,128] = (mean | log_var).
    w_head = jnp.concatenate([wmean, wlv], axis=1)

    # Decoder input weight: [64, 384].
    w_dec_in = wz

    # Reconstruction block-diagonal weight: level_1 [N,384]=(B|A|C) -> [N,256]=(B|A|C|pad).
    w_dec_out = jnp.zeros((DIM_TOTAL, RECON_PAD), jnp.float32)
    w_dec_out = w_dec_out.at[0:DIM_1B, 0:B_DIM].set(w4b)
    w_dec_out = w_dec_out.at[DIM_1B:DIM_1B + DIM_1A, B_DIM:B_DIM + A_DIM].set(w4a)
    w_dec_out = w_dec_out.at[DIM_1B + DIM_1A:, B_DIM + A_DIM:RECON_TOTAL].set(w4c)

    def _pad_row(v):
        return jnp.pad(v, ((0, 0), (0, DIM_TOTAL - v.shape[1])))

    # One [6, 384] f32 slab for every small per-feature vector (1 DMA).
    vec = jnp.concatenate([
        jnp.concatenate([g1b, g1a, g1c], axis=1),            # row 0: encoder BN gamma
        jnp.concatenate([be1b, be1a, be1c], axis=1),          # row 1: encoder BN beta
        gz,                                                   # row 2: decoder BN gamma
        bez,                                                  # row 3: decoder BN beta
        _pad_row(jnp.concatenate([bmean, blv], axis=1)),      # row 4: head bias  [0:128]
        _pad_row(jnp.concatenate([b4b, b4a, b4c], axis=1)),   # row 5: recon bias [0:240]
    ], axis=0)

    return (w_enc.astype(jnp.bfloat16),
            w_head.astype(jnp.bfloat16),
            w_dec_in.astype(jnp.bfloat16),
            w_dec_out.astype(jnp.bfloat16),
            vec.astype(jnp.float32))


def _pad_rows(a, n_pad):
    n = a.shape[0]
    if n == n_pad:
        return a
    return jnp.concatenate(
        [a, jnp.zeros((n_pad - n,) + a.shape[1:], a.dtype)], axis=0)


# --------------------------------------------------------------------------
# Pallas forward (whole thing is jitted so packing/slicing fuse with dispatch)
# --------------------------------------------------------------------------
@jax.jit
def fc_vae_abc_forward(packed_params, data_e, data_m, data_c, eps):
    w_enc, w_head, w_dec_in, w_dec_out, vec = packed_params
    n = data_e.shape[0]
    n_pad = ((n + 15) // 16) * 16              # bf16 LHS sublane tile (16 rows)
    inv_n = 1.0 / float(n)

    # Packed bf16 input slab [n_pad, 256] = (data_m | data_e | data_c | 0-pad).
    x = jnp.concatenate([data_m, data_e, data_c], axis=1).astype(jnp.float32)
    x = jnp.pad(x, ((0, 0), (0, IN_PAD - IN_TOTAL)))
    x = _pad_rows(x, n_pad).astype(jnp.bfloat16)
    eps_p = _pad_rows(eps.astype(jnp.float32), n_pad)

    def kernel(x_ref, eps_ref, w_enc_ref, w_head_ref, w_dec_in_ref,
               w_dec_out_ref, vec_ref, out_ref):
        # Row mask so padded rows never enter the BN batch statistics.
        row_mask = (jax.lax.broadcasted_iota(jnp.int32, (n_pad, 1), 0) < n
                    ).astype(jnp.float32)

        def bn_lrelu(y, g, beta):
            # Training-mode BN (biased variance); per-feature scale/shift so
            # the per-element normalize is just one mul + one add.
            ym = y * row_mask
            mu = jnp.sum(ym, axis=0, keepdims=True) * inv_n
            ex2 = jnp.sum(ym * ym, axis=0, keepdims=True) * inv_n
            var = jnp.maximum(ex2 - mu * mu, 0.0)
            scale = jax.lax.rsqrt(var + BN_EPS) * g
            shift = beta - mu * scale
            yn = y * scale + shift
            return jnp.maximum(yn, LEAKY_SLOPE * yn)   # LeakyReLU, slope in (0,1)

        # ---- encode: one block-diagonal matmul (B|A|C), BN+LeakyReLU fused ----
        h_enc = jnp.dot(x_ref[...], w_enc_ref[...],
                        preferred_element_type=jnp.float32)        # [N, 384]
        level_3 = bn_lrelu(h_enc, vec_ref[0:1, :], vec_ref[1:2, :])

        # ---- fused latent heads: (mean | log_var) in one matmul ----
        head = jnp.dot(level_3.astype(jnp.bfloat16), w_head_ref[...],
                       preferred_element_type=jnp.float32)
        head = head + vec_ref[4:5, 0:2 * LATENT_DIM]               # [N, 128]
        mean = head[:, 0:LATENT_DIM]
        log_var = head[:, LATENT_DIM:2 * LATENT_DIM]

        # ---- reparameterize ----
        z = eps_ref[...] * jnp.exp(0.5 * log_var) + mean           # [N, 64]

        # ---- decode ----
        h_dec = jnp.dot(z.astype(jnp.bfloat16), w_dec_in_ref[...],
                        preferred_element_type=jnp.float32)        # [N, 384]
        level_1 = bn_lrelu(h_dec, vec_ref[2:3, :], vec_ref[3:4, :])

        recon = jnp.dot(level_1.astype(jnp.bfloat16), w_dec_out_ref[...],
                        preferred_element_type=jnp.float32)
        recon = recon + vec_ref[5:6, 0:RECON_PAD]                  # [N, 256] (B|A|C|pad)

        # ---- direct slab stores, all seams 128-lane aligned ----
        out_ref[:, Z_OFF:Z_OFF + LATENT_DIM] = z                   # [  0: 64]
        out_ref[:, MEAN_OFF:MEAN_OFF + 2 * LATENT_DIM] = head      # [128:256]
        out_ref[:, RB_OFF:RB_OFF + RECON_PAD] = recon              # [256:512]

    vmem = pl.BlockSpec(memory_space=pltpu.MemorySpace.VMEM)
    out = pl.pallas_call(
        kernel,
        out_shape=jax.ShapeDtypeStruct((n_pad, OUT_SLAB), jnp.float32),
        in_specs=[vmem] * 7,
        out_specs=vmem,
    )(x, eps_p, w_enc, w_head, w_dec_in, w_dec_out, vec)

    z = out[:n, Z_OFF:Z_OFF + LATENT_DIM]
    mean = out[:n, MEAN_OFF:MEAN_OFF + LATENT_DIM]
    log_var = out[:n, LV_OFF:LV_OFF + LATENT_DIM]
    recon_b = out[:n, RB_OFF:RB_OFF + B_DIM]
    recon_a = out[:n, RA_OFF:RA_OFF + A_DIM]
    recon_c = out[:n, RC_OFF:RC_OFF + C_DIM]
    return z, [recon_a, recon_b, recon_c], mean, log_var


# --------------------------------------------------------------------------
# Pure-JAX reference (mirrors the PyTorch forward, bf16 at the matmuls)
# --------------------------------------------------------------------------
def _reference_forward(raw_params, data_e, data_m, data_c, eps):
    (w1a, b1a, g1a, be1a, w1b, b1b, g1b, be1b, w1c, b1c, g1c, be1c,
     wmean, bmean, wlv, blv, wz, bz, gz, bez,
     w4b, b4b, w4a, b4a, w4c, b4c) = raw_params

    def lin(x, w, b):
        return jnp.dot(x.astype(jnp.bfloat16), w.astype(jnp.bfloat16),
                       preferred_element_type=jnp.float32) + b

    def bn_lrelu(y, g, beta):
        mu = jnp.mean(y, axis=0, keepdims=True)
        var = jnp.mean((y - mu) ** 2, axis=0, keepdims=True)
        yn = (y - mu) * jax.lax.rsqrt(var + BN_EPS) * g + beta
        return jnp.where(yn >= 0.0, yn, LEAKY_SLOPE * yn)

    l2a = bn_lrelu(lin(data_e, w1a, b1a), g1a, be1a)
    l2b = bn_lrelu(lin(data_m, w1b, b1b), g1b, be1b)
    l2c = bn_lrelu(lin(data_c, w1c, b1c), g1c, be1c)
    l3 = jnp.concatenate([l2b, l2a, l2c], axis=1)
    mean = lin(l3, wmean, bmean)
    log_var = lin(l3, wlv, blv)
    z = eps * jnp.exp(0.5 * log_var) + mean
    l1 = bn_lrelu(lin(z, wz, bz), gz, bez)
    rb = lin(l1[:, 0:DIM_1B], w4b, b4b)
    ra = lin(l1[:, DIM_1B:DIM_1B + DIM_1A], w4a, b4a)
    rc = lin(l1[:, DIM_1B + DIM_1A:], w4c, b4c)
    return z, [ra, rb, rc], mean, log_var


# --------------------------------------------------------------------------
# Parameter init (PyTorch-like uniform for Linear, near-identity BN)
# --------------------------------------------------------------------------
def _init_params(key):
    ks = list(jax.random.split(key, 32))

    def linear(kw, kb, in_dim, out_dim):
        bound = 1.0 / jnp.sqrt(jnp.float32(in_dim))
        w = jax.random.uniform(kw, (in_dim, out_dim), jnp.float32, -bound, bound)
        b = jax.random.uniform(kb, (1, out_dim), jnp.float32, -bound, bound)
        return w, b

    def bn(kg, kb, dim):
        g = 1.0 + 0.05 * jax.random.normal(kg, (1, dim), jnp.float32)
        b = 0.05 * jax.random.normal(kb, (1, dim), jnp.float32)
        return g, b

    w1a, b1a = linear(ks[0], ks[1], A_DIM, DIM_1A)
    g1a, be1a = bn(ks[2], ks[3], DIM_1A)
    w1b, b1b = linear(ks[4], ks[5], B_DIM, DIM_1B)
    g1b, be1b = bn(ks[6], ks[7], DIM_1B)
    w1c, b1c = linear(ks[8], ks[9], C_DIM, DIM_1C)
    g1c, be1c = bn(ks[10], ks[11], DIM_1C)

    wmean, bmean = linear(ks[12], ks[13], DIM_TOTAL, LATENT_DIM)
    wlv, blv = linear(ks[14], ks[15], DIM_TOTAL, LATENT_DIM)

    wz, bz = linear(ks[16], ks[17], LATENT_DIM, DIM_TOTAL)
    gz, bez = bn(ks[18], ks[19], DIM_TOTAL)

    w4b, b4b = linear(ks[20], ks[21], DIM_1B, B_DIM)
    w4a, b4a = linear(ks[22], ks[23], DIM_1A, A_DIM)
    w4c, b4c = linear(ks[24], ks[25], DIM_1C, C_DIM)

    return (w1a, b1a, g1a, be1a,
            w1b, b1b, g1b, be1b,
            w1c, b1c, g1c, be1c,
            wmean, bmean, wlv, blv,
            wz, bz, gz, bez,
            w4b, b4b, w4a, b4a, w4c, b4c)


if __name__ == "__main__":
    key = jax.random.PRNGKey(0)
    k_params, k_e, k_m, k_c, k_eps = jax.random.split(key, 5)

    raw_params = _init_params(k_params)
    packed_params = pack_params(raw_params)

    data_e = jax.random.normal(k_e, (BATCH, A_DIM), jnp.float32)   # omics A
    data_m = jax.random.normal(k_m, (BATCH, B_DIM), jnp.float32)   # omics B
    data_c = jax.random.normal(k_c, (BATCH, C_DIM), jnp.float32)   # omics C
    eps = jax.random.normal(k_eps, (BATCH, LATENT_DIM), jnp.float32)

    z, recon_x, mean, log_var = fc_vae_abc_forward(
        packed_params, data_e, data_m, data_c, eps)
    jax.block_until_ready((z, recon_x, mean, log_var))

    assert z.shape == (BATCH, LATENT_DIM)
    assert recon_x[0].shape == (BATCH, A_DIM)
    assert recon_x[1].shape == (BATCH, B_DIM)
    assert recon_x[2].shape == (BATCH, C_DIM)
    assert mean.shape == (BATCH, LATENT_DIM)
    assert log_var.shape == (BATCH, LATENT_DIM)

    # Correctness vs a pure-JAX mirror of the PyTorch forward (bf16 matmuls).
    z_r, recon_r, mean_r, lv_r = _reference_forward(
        raw_params, data_e, data_m, data_c, eps)
    tol = dict(rtol=5e-2, atol=5e-2)
    assert jnp.allclose(z, z_r, **tol)
    assert jnp.allclose(mean, mean_r, **tol)
    assert jnp.allclose(log_var, lv_r, **tol)
    assert jnp.allclose(recon_x[0], recon_r[0], **tol)
    assert jnp.allclose(recon_x[1], recon_r[1], **tol)
    assert jnp.allclose(recon_x[2], recon_r[2], **tol)

    print("KERNEL_OK")
</pallas_src>

<mosaic_0001>
module attributes {stable_mosaic.version = 11 : i64} {
  func.func @kernel(%arg0: memref<16x256xbf16, #tpu.memory_space<vmem>>, %arg1: memref<16x64xf32, #tpu.memory_space<vmem>>, %arg2: memref<256x384xbf16, #tpu.memory_space<vmem>>, %arg3: memref<384x128xbf16, #tpu.memory_space<vmem>>, %arg4: memref<64x384xbf16, #tpu.memory_space<vmem>>, %arg5: memref<384x256xbf16, #tpu.memory_space<vmem>>, %arg6: memref<6x384xf32, #tpu.memory_space<vmem>>, %arg7: memref<16x512xf32, #tpu.memory_space<vmem>>) attributes {dimension_semantics = [], scalar_prefetch = 0 : i64, scratch_operands = 0 : i64, tpu.core_type = #tpu.core_type<tc>} {
    %0 = tpu.iota {dimensions = array<i32: 0>} : vector<16x1xi32>
    %c4_i32 = arith.constant 4 : i32
    %1 = vector.broadcast %c4_i32 : i32 to vector<16x1xi32>
    %2 = arith.cmpi slt, %0, %1 : vector<16x1xi32>
    %3 = arith.extui %2 : vector<16x1xi1> to vector<16x1xi32>
    %4 = arith.sitofp %3 : vector<16x1xi32> to vector<16x1xf32>
    %c0 = arith.constant 0 : index
    %c0_0 = arith.constant 0 : index
    %5 = vector.load %arg0[%c0, %c0_0] : memref<16x256xbf16, #tpu.memory_space<vmem>>, vector<16x256xbf16>
    %c0_1 = arith.constant 0 : index
    %c0_2 = arith.constant 0 : index
    %6 = vector.load %arg2[%c0_1, %c0_2] : memref<256x384xbf16, #tpu.memory_space<vmem>>, vector<256x384xbf16>
    %cst = arith.constant dense<0.000000e+00> : vector<16x384xf32>
    %7 = tpu.matmul %5, %6, %cst {dimension_numbers = #tpu.dot_dimension_numbers<[1], [0], [0], [1], [0, 0, 1, 1], [], []>} : vector<16x256xbf16>, vector<256x384xbf16>, vector<16x384xf32> -> vector<16x384xf32>
    %c0_3 = arith.constant 0 : index
    %c0_4 = arith.constant 0 : index
    %8 = vector.load %arg6[%c0_3, %c0_4] : memref<6x384xf32, #tpu.memory_space<vmem>>, vector<1x384xf32>
    %c1 = arith.constant 1 : index
    %c0_5 = arith.constant 0 : index
    %9 = vector.load %arg6[%c1, %c0_5] : memref<6x384xf32, #tpu.memory_space<vmem>>, vector<1x384xf32>
    %10 = vector.broadcast %4 : vector<16x1xf32> to vector<16x384xf32>
    %11 = arith.mulf %7, %10 : vector<16x384xf32>
    %cst_6 = arith.constant dense<0.000000e+00> : vector<384xf32>
    %12 = vector.multi_reduction <add>, %11, %cst_6 [0] : vector<16x384xf32> to vector<384xf32>
    %13 = vector.shape_cast %12 : vector<384xf32> to vector<1x384xf32>
    %cst_7 = arith.constant 2.500000e-01 : f32
    %14 = vector.broadcast %cst_7 : f32 to vector<1x384xf32>
    %15 = arith.mulf %13, %14 : vector<1x384xf32>
    %16 = arith.mulf %11, %11 : vector<16x384xf32>
    %cst_8 = arith.constant dense<0.000000e+00> : vector<384xf32>
    %17 = vector.multi_reduction <add>, %16, %cst_8 [0] : vector<16x384xf32> to vector<384xf32>
    %18 = vector.shape_cast %17 : vector<384xf32> to vector<1x384xf32>
    %cst_9 = arith.constant 2.500000e-01 : f32
    %19 = vector.broadcast %cst_9 : f32 to vector<1x384xf32>
    %20 = arith.mulf %18, %19 : vector<1x384xf32>
    %21 = arith.mulf %15, %15 : vector<1x384xf32>
    %22 = arith.subf %20, %21 : vector<1x384xf32>
    %cst_10 = arith.constant 0.000000e+00 : f32
    %23 = vector.broadcast %cst_10 : f32 to vector<1x384xf32>
    %24 = arith.maximumf %22, %23 : vector<1x384xf32>
    %cst_11 = arith.constant 9.99999974E-6 : f32
    %25 = vector.broadcast %cst_11 : f32 to vector<1x384xf32>
    %26 = arith.addf %24, %25 : vector<1x384xf32>
    %27 = math.rsqrt %26 : vector<1x384xf32>
    %28 = arith.mulf %27, %8 : vector<1x384xf32>
    %29 = arith.mulf %15, %28 : vector<1x384xf32>
    %30 = arith.subf %9, %29 : vector<1x384xf32>
    %31 = vector.broadcast %28 : vector<1x384xf32> to vector<16x384xf32>
    %32 = arith.mulf %7, %31 : vector<16x384xf32>
    %33 = vector.broadcast %30 : vector<1x384xf32> to vector<16x384xf32>
    %34 = arith.addf %32, %33 : vector<16x384xf32>
    %cst_12 = arith.constant 2.000000e-01 : f32
    %35 = vector.broadcast %cst_12 : f32 to vector<16x384xf32>
    %36 = arith.mulf %35, %34 : vector<16x384xf32>
    %37 = arith.maximumf %34, %36 : vector<16x384xf32>
    %38 = arith.truncf %37 : vector<16x384xf32> to vector<16x384xbf16>
    %c0_13 = arith.constant 0 : index
    %c0_14 = arith.constant 0 : index
    %39 = vector.load %arg3[%c0_13, %c0_14] : memref<384x128xbf16, #tpu.memory_space<vmem>>, vector<384x128xbf16>
    %cst_15 = arith.constant dense<0.000000e+00> : vector<16x128xf32>
    %40 = tpu.matmul %38, %39, %cst_15 {dimension_numbers = #tpu.dot_dimension_numbers<[1], [0], [0], [1], [0, 0, 1, 1], [], []>} : vector<16x384xbf16>, vector<384x128xbf16>, vector<16x128xf32> -> vector<16x128xf32>
    %c4 = arith.constant 4 : index
    %c0_16 = arith.constant 0 : index
    %41 = vector.load %arg6[%c4, %c0_16] : memref<6x384xf32, #tpu.memory_space<vmem>>, vector<1x128xf32>
    %42 = vector.broadcast %41 : vector<1x128xf32> to vector<16x128xf32>
    %43 = arith.addf %40, %42 : vector<16x128xf32>
    %44 = vector.extract_strided_slice %43 {offsets = [0, 0], sizes = [16, 64], strides = [1, 1]} : vector<16x128xf32> to vector<16x64xf32>
    %45 = vector.extract_strided_slice %43 {offsets = [0, 64], sizes = [16, 64], strides = [1, 1]} : vector<16x128xf32> to vector<16x64xf32>
    %c0_17 = arith.constant 0 : index
    %c0_18 = arith.constant 0 : index
    %46 = vector.load %arg1[%c0_17, %c0_18] : memref<16x64xf32, #tpu.memory_space<vmem>>, vector<16x64xf32>
    %cst_19 = arith.constant 5.000000e-01 : f32
    %47 = vector.broadcast %cst_19 : f32 to vector<16x64xf32>
    %48 = arith.mulf %47, %45 : vector<16x64xf32>
    %49 = math.exp %48 : vector<16x64xf32>
    %50 = arith.mulf %46, %49 : vector<16x64xf32>
    %51 = arith.addf %50, %44 : vector<16x64xf32>
    %52 = arith.truncf %51 : vector<16x64xf32> to vector<16x64xbf16>
    %c0_20 = arith.constant 0 : index
    %c0_21 = arith.constant 0 : index
    %53 = vector.load %arg4[%c0_20, %c0_21] : memref<64x384xbf16, #tpu.memory_space<vmem>>, vector<64x384xbf16>
    %cst_22 = arith.constant dense<0.000000e+00> : vector<16x384xf32>
    %54 = tpu.matmul %52, %53, %cst_22 {dimension_numbers = #tpu.dot_dimension_numbers<[1], [0], [0], [1], [0, 0, 1, 1], [], []>} : vector<16x64xbf16>, vector<64x384xbf16>, vector<16x384xf32> -> vector<16x384xf32>
    %c2 = arith.constant 2 : index
    %c0_23 = arith.constant 0 : index
    %55 = vector.load %arg6[%c2, %c0_23] : memref<6x384xf32, #tpu.memory_space<vmem>>, vector<1x384xf32>
    %c3 = arith.constant 3 : index
    %c0_24 = arith.constant 0 : index
    %56 = vector.load %arg6[%c3, %c0_24] : memref<6x384xf32, #tpu.memory_space<vmem>>, vector<1x384xf32>
    %57 = vector.broadcast %4 : vector<16x1xf32> to vector<16x384xf32>
    %58 = arith.mulf %54, %57 : vector<16x384xf32>
    %cst_25 = arith.constant dense<0.000000e+00> : vector<384xf32>
    %59 = vector.multi_reduction <add>, %58, %cst_25 [0] : vector<16x384xf32> to vector<384xf32>
    %60 = vector.shape_cast %59 : vector<384xf32> to vector<1x384xf32>
    %cst_26 = arith.constant 2.500000e-01 : f32
    %61 = vector.broadcast %cst_26 : f32 to vector<1x384xf32>
    %62 = arith.mulf %60, %61 : vector<1x384xf32>
    %63 = arith.mulf %58, %58 : vector<16x384xf32>
    %cst_27 = arith.constant dense<0.000000e+00> : vector<384xf32>
    %64 = vector.multi_reduction <add>, %63, %cst_27 [0] : vector<16x384xf32> to vector<384xf32>
    %65 = vector.shape_cast %64 : vector<384xf32> to vector<1x384xf32>
    %cst_28 = arith.constant 2.500000e-01 : f32
    %66 = vector.broadcast %cst_28 : f32 to vector<1x384xf32>
    %67 = arith.mulf %65, %66 : vector<1x384xf32>
    %68 = arith.mulf %62, %62 : vector<1x384xf32>
    %69 = arith.subf %67, %68 : vector<1x384xf32>
    %cst_29 = arith.constant 0.000000e+00 : f32
    %70 = vector.broadcast %cst_29 : f32 to vector<1x384xf32>
    %71 = arith.maximumf %69, %70 : vector<1x384xf32>
    %cst_30 = arith.constant 9.99999974E-6 : f32
    %72 = vector.broadcast %cst_30 : f32 to vector<1x384xf32>
    %73 = arith.addf %71, %72 : vector<1x384xf32>
    %74 = math.rsqrt %73 : vector<1x384xf32>
    %75 = arith.mulf %74, %55 : vector<1x384xf32>
    %76 = arith.mulf %62, %75 : vector<1x384xf32>
    %77 = arith.subf %56, %76 : vector<1x384xf32>
    %78 = vector.broadcast %75 : vector<1x384xf32> to vector<16x384xf32>
    %79 = arith.mulf %54, %78 : vector<16x384xf32>
    %80 = vector.broadcast %77 : vector<1x384xf32> to vector<16x384xf32>
    %81 = arith.addf %79, %80 : vector<16x384xf32>
    %cst_31 = arith.constant 2.000000e-01 : f32
    %82 = vector.broadcast %cst_31 : f32 to vector<16x384xf32>
    %83 = arith.mulf %82, %81 : vector<16x384xf32>
    %84 = arith.maximumf %81, %83 : vector<16x384xf32>
    %85 = arith.truncf %84 : vector<16x384xf32> to vector<16x384xbf16>
    %c0_32 = arith.constant 0 : index
    %c0_33 = arith.constant 0 : index
    %86 = vector.load %arg5[%c0_32, %c0_33] : memref<384x256xbf16, #tpu.memory_space<vmem>>, vector<384x256xbf16>
    %cst_34 = arith.constant dense<0.000000e+00> : vector<16x256xf32>
    %87 = tpu.matmul %85, %86, %cst_34 {dimension_numbers = #tpu.dot_dimension_numbers<[1], [0], [0], [1], [0, 0, 1, 1], [], []>} : vector<16x384xbf16>, vector<384x256xbf16>, vector<16x256xf32> -> vector<16x256xf32>
    %c5 = arith.constant 5 : index
    %c0_35 = arith.constant 0 : index
    %88 = vector.load %arg6[%c5, %c0_35] : memref<6x384xf32, #tpu.memory_space<vmem>>, vector<1x256xf32>
    %89 = vector.broadcast %88 : vector<1x256xf32> to vector<16x256xf32>
    %90 = arith.addf %87, %89 : vector<16x256xf32>
    %c0_36 = arith.constant 0 : index
    %c0_37 = arith.constant 0 : index
    %91 = vector.load %arg7[%c0_36, %c0_37] : memref<16x512xf32, #tpu.memory_space<vmem>>, vector<16x64xf32>
    tpu.vector_store %arg7[%c0_36, %c0_37], %51 {strides = array<i32>} : memref<16x512xf32, #tpu.memory_space<vmem>>, vector<16x64xf32>,
    %c0_38 = arith.constant 0 : index
    %c128 = arith.constant 128 : index
    %92 = vector.load %arg7[%c0_38, %c128] : memref<16x512xf32, #tpu.memory_space<vmem>>, vector<16x128xf32>
    tpu.vector_store %arg7[%c0_38, %c128], %43 {strides = array<i32>} : memref<16x512xf32, #tpu.memory_space<vmem>>, vector<16x128xf32>,
    %c0_39 = arith.constant 0 : index
    %c256 = arith.constant 256 : index
    %93 = vector.load %arg7[%c0_39, %c256] : memref<16x512xf32, #tpu.memory_space<vmem>>, vector<16x256xf32>
    tpu.vector_store %arg7[%c0_39, %c256], %90 {strides = array<i32>} : memref<16x512xf32, #tpu.memory_space<vmem>>, vector<16x256xf32>,
    return
  }
}

</mosaic_0001>

<llo_original>
// kernel: fc_vae_abc_forward.1
$region0: #{fc_vae_abc_forward.1}
  #allocation0 [shape = 'u32[]', space=smem, size = 0x4, offset = 0x4, fixed_abs, tag = 'smem constant byte address 0x4 - core index']
  #allocation1 [shape = 'u32[144,128]{1,0:T(1,128)}', space=vmem, size = 0x12000, scoped, tag = 'internal scratch']
  %s0 = inlined_call_operand.vmem [shape: bf16[16,256], index: 0, kind: input, shape index: {}]
  %s1 = inlined_call_operand.vmem [shape: f32[16,64], index: 1, kind: input, shape index: {}]
  %s2 = inlined_call_operand.hbm [shape: bf16[256,384], index: 2, kind: input, shape index: {}]
  %s3 = inlined_call_operand.hbm [shape: bf16[384,128], index: 3, kind: input, shape index: {}]
  %s4 = inlined_call_operand.hbm [shape: bf16[64,384], index: 4, kind: input, shape index: {}]
  %s5 = inlined_call_operand.hbm [shape: bf16[384,256], index: 5, kind: input, shape index: {}]
  %s6 = inlined_call_operand.vmem [shape: f32[6,384], index: 6, kind: input, shape index: {}]
  %s7 = inlined_call_operand.vmem [shape: f32[16,512], index: 7, kind: output, shape index: {}]
  %s8 = sld [smem:[#allocation0]]
  $region54: #{fc_vae_abc_forward.1} parent=0
    _
  %s10 = ssub.s32 1, %s8
  %s11 = scalar_select 0, %s10, %s8
  $region1: #{fc_vae_abc_forward.1} parent=0
    #allocation2 [shape = 'u8[196608]{0}', space=vmem, size = 0x30000, scoped, tag = 'input window, operand 2, single buffered']
    #allocation3 [shape = 's32[1]{0}', space=sflag, size = 0x4, scoped, tag = 'scoped memory for fc_vae_abc_forward.1']
    #allocation4 [shape = 'u8[98304]{0}', space=vmem, size = 0x18000, scoped, tag = 'input window, operand 3, single buffered']
    #allocation5 [shape = 's32[1]{0}', space=sflag, size = 0x4, scoped, tag = 'scoped memory for fc_vae_abc_forward.1']
    #allocation6 [shape = 'u8[49152]{0}', space=vmem, size = 0xc000, scoped, tag = 'input window, operand 4, single buffered']
    #allocation7 [shape = 'u8[196608]{0}', space=vmem, size = 0x30000, scoped, tag = 'input window, operand 5, single buffered']
    #allocation8 [shape = 's32[1]{0}', space=sflag, size = 0x4, scoped, tag = 'scoped memory for fc_vae_abc_forward.1']
    %12 = vsyncpa [#allocation3], 0
    %13 = vsyncpa [#allocation5], 0
    %14 = vsyncpa [#allocation8], 0
    // Predicated region
    $region2: #{fc_vae_abc_forward.1} parent=1 // pred_check
      _
    $region3: #{fc_vae_abc_forward.1} parent=1 // pred_check_branch
      %16 = sbr.rel (0) target = $region5
    $region4: #{fc_vae_abc_forward.1} parent=1 // pred_region
      _
    $region5: #{fc_vae_abc_forward.1} parent=1 // pred_fallthru
      _
    // Predicated region
    $region6: #{fc_vae_abc_forward.1} parent=1 // pred_check
      _
    $region7: #{fc_vae_abc_forward.1} parent=1 // pred_check_branch
      %18 = sbr.rel (0) target = $region9
    $region8: #{fc_vae_abc_forward.1} parent=1 // pred_region
      _
    $region9: #{fc_vae_abc_forward.1} parent=1 // pred_fallthru
      _
    // Predicated region
    $region10: #{fc_vae_abc_forward.1} parent=1 // pred_check
      _
    $region11: #{fc_vae_abc_forward.1} parent=1 // pred_check_branch
      %20 = sbr.rel (0) target = $region13
    $region12: #{fc_vae_abc_forward.1} parent=1 // pred_region
      %s22 = ssub.s32 6144, 6144
      %23 = vsyncadd [#allocation3], %s22
      %s24 = sshll.u32 [#allocation2], 4
      %s25 = int_to_ptr.vmem [resolvable:$true] %s24
      %30 = dma.hbm_to_vmem [thread:$0]  %s2, 6144, %s25, [#allocation3], 192, 192, 12
    $region13: #{fc_vae_abc_forward.1} parent=1 // pred_fallthru
      _
    // Predicated region
    $region14: #{fc_vae_abc_forward.1} parent=1 // pred_check
      _
    $region15: #{fc_vae_abc_forward.1} parent=1 // pred_check_branch
      %32 = sbr.rel (0) target = $region17
    $region16: #{fc_vae_abc_forward.1} parent=1 // pred_region
      %s34 = ssub.s32 3072, 3072
      %35 = vsyncadd [#allocation5], %s34
      %s36 = sshll.u32 [#allocation4], 4
      %s37 = int_to_ptr.vmem [resolvable:$true] %s36
      %42 = dma.hbm_to_vmem [thread:$0]  %s3, 3072, %s37, [#allocation5], 64, 64, 4
    $region17: #{fc_vae_abc_forward.1} parent=1 // pred_fallthru
      _
    // Predicated region
    $region18: #{fc_vae_abc_forward.1} parent=1 // pred_check
      _
    $region19: #{fc_vae_abc_forward.1} parent=1 // pred_check_branch
      %44 = sbr.rel (0) target = $region21
    $region20: #{fc_vae_abc_forward.1} parent=1 // pred_region
      %s46 = ssub.s32 1536, 1536
      %47 = vsyncadd [#allocation5], %s46
      %s48 = sshll.u32 [#allocation6], 4
      %s49 = int_to_ptr.vmem [resolvable:$true] %s48
      %54 = dma.hbm_to_vmem [thread:$0]  %s4, 1536, %s49, [#allocation5], 192, 192, 12
    $region21: #{fc_vae_abc_forward.1} parent=1 // pred_fallthru
      _
    // Predicated region
    $region22: #{fc_vae_abc_forward.1} parent=1 // pred_check
      _
    $region23: #{fc_vae_abc_forward.1} parent=1 // pred_check_branch
      %56 = sbr.rel (0) target = $region25
    $region24: #{fc_vae_abc_forward.1} parent=1 // pred_region
      %s58 = ssub.s32 6144, 6144
      %59 = vsyncadd [#allocation8], %s58
      %s60 = sshll.u32 [#allocation7], 4
      %s61 = int_to_ptr.vmem [resolvable:$true] %s60
      %66 = dma.hbm_to_vmem [thread:$0]  %s5, 6144, %s61, [#allocation8], 128, 128, 8
    $region25: #{fc_vae_abc_forward.1} parent=1 // pred_fallthru
      _
    // Predicated region
    $region26: #{fc_vae_abc_forward.1} parent=1 // pred_check
      _
    $region27: #{fc_vae_abc_forward.1} parent=1 // pred_check_branch
      %68 = sbr.rel (0) target = $region29
    $region28: #{fc_vae_abc_forward.1} parent=1 // pred_region
      _
    $region29: #{fc_vae_abc_forward.1} parent=1 // pred_fallthru
      _
    // Predicated region
    $region30: #{fc_vae_abc_forward.1} parent=1 // pred_check
      _
    $region31: #{fc_vae_abc_forward.1} parent=1 // pred_check_branch
      %70 = sbr.rel (0) target = $region33
    $region32: #{fc_vae_abc_forward.1} parent=1 // pred_region
      %71 = dma.done [#allocation3], 6144
    $region33: #{fc_vae_abc_forward.1} parent=1 // pred_fallthru
      _
    // Predicated region
    $region34: #{fc_vae_abc_forward.1} parent=1 // pred_check
      _
    $region35: #{fc_vae_abc_forward.1} parent=1 // pred_check_branch
      %73 = sbr.rel (0) target = $region37
    $region36: #{fc_vae_abc_forward.1} parent=1 // pred_region
      %74 = dma.done [#allocation5], 3072
    $region37: #{fc_vae_abc_forward.1} parent=1 // pred_fallthru
      _
    // Predicated region
    $region38: #{fc_vae_abc_forward.1} parent=1 // pred_check
      _
    $region39: #{fc_vae_abc_forward.1} parent=1 // pred_check_branch
      %76 = sbr.rel (0) target = $region41
    $region40: #{fc_vae_abc_forward.1} parent=1 // pred_region
      %77 = dma.done [#allocation5], 1536
    $region41: #{fc_vae_abc_forward.1} parent=1 // pred_fallthru
      _
    // Predicated region
    $region42: #{fc_vae_abc_forward.1} parent=1 // pred_check
      _
    $region43: #{fc_vae_abc_forward.1} parent=1 // pred_check_branch
      %79 = sbr.rel (0) target = $region45
    $region44: #{fc_vae_abc_forward.1} parent=1 // pred_region
      %80 = dma.done [#allocation8], 6144
    $region45: #{fc_vae_abc_forward.1} parent=1 // pred_fallthru
      _
    %v82 = vlaneseq
    %v83 = vshrl.u32 %v82, 7
    %v84 = vadd.s32 %v83, 8
    %vm85 = vcmp.lt.s32.totalorder %v83, 4
    %vm86 = vcmp.lt.s32.totalorder %v84, 4
    %v87 = vsel %vm85, 1, 0
    %v88 = vsel %vm86, 1, 0
    %v89 = vcvt.s32.f32 %v87
    %v90 = vcvt.s32.f32 %v88
    %v91 = vld [vmem:[%s0] sm:$0xff]
    %v92 = vld [vmem:[%s0 + $0x8] sm:$0xff]
    %v93 = vld [vmem:[#allocation2] sm:$0xff]
    %v94 = vld [vmem:[#allocation2 + $0x8] sm:$0xf]
    %v95 = vld [vmem:[#allocation2 + $0xc] sm:$0xff]
    %v96 = vld [vmem:[#allocation2 + $0x14] sm:$0xf]
    %v97 = vld [vmem:[#allocation2 + $0x18] sm:$0xff]
    %v98 = vld [vmem:[#allocation2 + $0x20] sm:$0xf]
    %v99 = vld [vmem:[#allocation2 + $0x24] sm:$0xff]
    %v100 = vld [vmem:[#allocation2 + $0x2c] sm:$0xf]
    %v101 = vld [vmem:[#allocation2 + $0x30] sm:$0xff]
    %v102 = vld [vmem:[#allocation2 + $0x38] sm:$0xf]
    %v103 = vld [vmem:[#allocation2 + $0x3c] sm:$0xff]
    %v104 = vld [vmem:[#allocation2 + $0x44] sm:$0xf]
    %v105 = vld [vmem:[#allocation2 + $0x48] sm:$0xff]
    %v106 = vld [vmem:[#allocation2 + $0x50] sm:$0xf]
    %v107 = vld [vmem:[#allocation2 + $0x54] sm:$0xff]
    %v108 = vld [vmem:[#allocation2 + $0x5c] sm:$0xf]
    %v109 = vld [vmem:[#allocation2 + $0x60] sm:$0xff]
    %v110 = vld [vmem:[#allocation2 + $0x68] sm:$0xf]
    %v111 = vld [vmem:[#allocation2 + $0x6c] sm:$0xff]
    %v112 = vld [vmem:[#allocation2 + $0x74] sm:$0xf]
    %v113 = vld [vmem:[#allocation2 + $0x78] sm:$0xff]
    %v114 = vld [vmem:[#allocation2 + $0x80] sm:$0xf]
    %v115 = vld [vmem:[#allocation2 + $0x84] sm:$0xff]
    %v116 = vld [vmem:[#allocation2 + $0x8c] sm:$0xf]
    %v117 = vld [vmem:[#allocation2 + $0x90] sm:$0xff]
    %v118 = vld [vmem:[#allocation2 + $0x98] sm:$0xf]
    %v119 = vld [vmem:[#allocation2 + $0x9c] sm:$0xff]
    %v120 = vld [vmem:[#allocation2 + $0xa4] sm:$0xf]
    %v121 = vld [vmem:[#allocation2 + $0xa8] sm:$0xff]
    %v122 = vld [vmem:[#allocation2 + $0xb0] sm:$0xf]
    %v123 = vld [vmem:[#allocation2 + $0xb4] sm:$0xff]
    %v124 = vld [vmem:[#allocation2 + $0xbc] sm:$0xf]
    %v125 = vld [vmem:[#allocation2 + $0xc0] sm:$0xff]
    %v126 = vld [vmem:[#allocation2 + $0xc8] sm:$0xf]
    %v127 = vld [vmem:[#allocation2 + $0xcc] sm:$0xff]
    %v128 = vld [vmem:[#allocation2 + $0xd4] sm:$0xf]
    %v129 = vld [vmem:[#allocation2 + $0xd8] sm:$0xff]
    %v130 = vld [vmem:[#allocation2 + $0xe0] sm:$0xf]
    %v131 = vld [vmem:[#allocation2 + $0xe4] sm:$0xff]
    %v132 = vld [vmem:[#allocation2 + $0xec] sm:$0xf]
    %v133 = vld [vmem:[#allocation2 + $0xf0] sm:$0xff]
    %v134 = vld [vmem:[#allocation2 + $0xf8] sm:$0xf]
    %v135 = vld [vmem:[#allocation2 + $0xfc] sm:$0xff]
    %v136 = vld [vmem:[#allocation2 + $0x104] sm:$0xf]
    %v137 = vld [vmem:[#allocation2 + $0x108] sm:$0xff]
    %v138 = vld [vmem:[#allocation2 + $0x110] sm:$0xf]
    %v139 = vld [vmem:[#allocation2 + $0x114] sm:$0xff]
    %v140 = vld [vmem:[#allocation2 + $0x11c] sm:$0xf]
    %v141 = vld [vmem:[#allocation2 + $0x120] sm:$0xff]
    %v142 = vld [vmem:[#allocation2 + $0x128] sm:$0xf]
    %v143 = vld [vmem:[#allocation2 + $0x12c] sm:$0xff]
    %v144 = vld [vmem:[#allocation2 + $0x134] sm:$0xf]
    %v145 = vld [vmem:[#allocation2 + $0x138] sm:$0xff]
    %v146 = vld [vmem:[#allocation2 + $0x140] sm:$0xf]
    %v147 = vld [vmem:[#allocation2 + $0x144] sm:$0xff]
    %v148 = vld [vmem:[#allocation2 + $0x14c] sm:$0xf]
    %v149 = vld [vmem:[#allocation2 + $0x150] sm:$0xff]
    %v150 = vld [vmem:[#allocation2 + $0x158] sm:$0xf]
    %v151 = vld [vmem:[#allocation2 + $0x15c] sm:$0xff]
    %v152 = vld [vmem:[#allocation2 + $0x164] sm:$0xf]
    %v153 = vld [vmem:[#allocation2 + $0x168] sm:$0xff]
    %v154 = vld [vmem:[#allocation2 + $0x170] sm:$0xf]
    %v155 = vld [vmem:[#allocation2 + $0x174] sm:$0xff]
    %v156 = vld [vmem:[#allocation2 + $0x17c] sm:$0xf]
    %v159 = vunpack.c.l.b16 %v91
    %v160 = vunpack.c.h.b16 %v91
    %v161 = vunpack.c.l.b16 %v92
    %v162 = vunpack.c.h.b16 %v92
    %v163 = vpack.c.b16 %v161, %v159
    %v164 = vpack.c.b16 %v162, %v160
    %v231 = vunpack.c.l.b16 %v93
    %v232 = vunpack.c.h.b16 %v93
    %v233 = vunpack.c.l.b16 %v94
    %v234 = vunpack.c.l.b16 %v95
    %v235 = vunpack.c.h.b16 %v95
    %v236 = vunpack.c.l.b16 %v96
    %v237 = vunpack.c.l.b16 %v97
    %v238 = vunpack.c.h.b16 %v97
    %v239 = vunpack.c.l.b16 %v98
    %v240 = vunpack.c.l.b16 %v99
    %v241 = vunpack.c.h.b16 %v99
    %v242 = vunpack.c.l.b16 %v100
    %v243 = vunpack.c.l.b16 %v101
    %v244 = vunpack.c.h.b16 %v101
    %v245 = vunpack.c.l.b16 %v102
    %v246 = vunpack.c.l.b16 %v103
    %v247 = vunpack.c.h.b16 %v103
    %v248 = vunpack.c.l.b16 %v104
    %v249 = vunpack.c.l.b16 %v105
    %v250 = vunpack.c.h.b16 %v105
    %v251 = vunpack.c.l.b16 %v106
    %v252 = vunpack.c.l.b16 %v107
    %v253 = vunpack.c.h.b16 %v107
    %v254 = vunpack.c.l.b16 %v108
    %v255 = vunpack.c.l.b16 %v109
    %v256 = vunpack.c.h.b16 %v109
    %v257 = vunpack.c.l.b16 %v110
    %v258 = vunpack.c.l.b16 %v111
    %v259 = vunpack.c.h.b16 %v111
    %v260 = vunpack.c.l.b16 %v112
    %v261 = vunpack.c.l.b16 %v113
    %v262 = vunpack.c.h.b16 %v113
    %v263 = vunpack.c.l.b16 %v114
    %v264 = vunpack.c.l.b16 %v115
    %v265 = vunpack.c.h.b16 %v115
    %v266 = vunpack.c.l.b16 %v116
    %v267 = vunpack.c.l.b16 %v117
    %v268 = vunpack.c.h.b16 %v117
    %v269 = vunpack.c.l.b16 %v118
    %v270 = vunpack.c.l.b16 %v119
    %v271 = vunpack.c.h.b16 %v119
    %v272 = vunpack.c.l.b16 %v120
    %v273 = vunpack.c.l.b16 %v121
    %v274 = vunpack.c.h.b16 %v121
    %v275 = vunpack.c.l.b16 %v122
    %v276 = vunpack.c.l.b16 %v123
    %v277 = vunpack.c.h.b16 %v123
    %v278 = vunpack.c.l.b16 %v124
    %v279 = vunpack.c.l.b16 %v125
    %v280 = vunpack.c.h.b16 %v125
    %v281 = vunpack.c.l.b16 %v126
    %v282 = vunpack.c.l.b16 %v127
    %v283 = vunpack.c.h.b16 %v127
    %v284 = vunpack.c.l.b16 %v128
    %v285 = vunpack.c.l.b16 %v129
    %v286 = vunpack.c.h.b16 %v129
    %v287 = vunpack.c.l.b16 %v130
    %v288 = vunpack.c.l.b16 %v131
    %v289 = vunpack.c.h.b16 %v131
    %v290 = vunpack.c.l.b16 %v132
    %v291 = vunpack.c.l.b16 %v133
    %v292 = vunpack.c.h.b16 %v133
    %v293 = vunpack.c.l.b16 %v134
    %v294 = vunpack.c.l.b16 %v135
    %v295 = vunpack.c.h.b16 %v135
    %v296 = vunpack.c.l.b16 %v136
    %v297 = vunpack.c.l.b16 %v137
    %v298 = vunpack.c.h.b16 %v137
    %v299 = vunpack.c.l.b16 %v138
    %v300 = vunpack.c.l.b16 %v139
    %v301 = vunpack.c.h.b16 %v139
    %v302 = vunpack.c.l.b16 %v140
    %v303 = vunpack.c.l.b16 %v141
    %v304 = vunpack.c.h.b16 %v141
    %v305 = vunpack.c.l.b16 %v142
    %v306 = vunpack.c.l.b16 %v143
    %v307 = vunpack.c.h.b16 %v143
    %v308 = vunpack.c.l.b16 %v144
    %v309 = vunpack.c.l.b16 %v145
    %v310 = vunpack.c.h.b16 %v145
    %v311 = vunpack.c.l.b16 %v146
    %v312 = vunpack.c.l.b16 %v147
    %v313 = vunpack.c.h.b16 %v147
    %v314 = vunpack.c.l.b16 %v148
    %v315 = vunpack.c.l.b16 %v149
    %v316 = vunpack.c.h.b16 %v149
    %v317 = vunpack.c.l.b16 %v150
    %v318 = vunpack.c.l.b16 %v151
    %v319 = vunpack.c.h.b16 %v151
    %v320 = vunpack.c.l.b16 %v152
    %v321 = vunpack.c.l.b16 %v153
    %v322 = vunpack.c.h.b16 %v153
    %v323 = vunpack.c.l.b16 %v154
    %v324 = vunpack.c.l.b16 %v155
    %v325 = vunpack.c.h.b16 %v155
    %v326 = vunpack.c.l.b16 %v156
    %v327 = vpack.c.b16 %v234, %v231
    %v328 = vpack.c.b16 %v235, %v232
    %v329 = vpack.c.b16 %v236, %v233
    %v330 = vpack.c.b16 %v240, %v237
    %v331 = vpack.c.b16 %v241, %v238
    %v332 = vpack.c.b16 %v242, %v239
    %v333 = vpack.c.b16 %v246, %v243
    %v334 = vpack.c.b16 %v247, %v244
    %v335 = vpack.c.b16 %v248, %v245
    %v336 = vpack.c.b16 %v252, %v249
    %v337 = vpack.c.b16 %v253, %v250
    %v338 = vpack.c.b16 %v254, %v251
    %v339 = vpack.c.b16 %v258, %v255
    %v340 = vpack.c.b16 %v259, %v256
    %v341 = vpack.c.b16 %v260, %v257
    %v342 = vpack.c.b16 %v264, %v261
    %v343 = vpack.c.b16 %v265, %v262
    %v344 = vpack.c.b16 %v266, %v263
    %v345 = vpack.c.b16 %v270, %v267
    %v346 = vpack.c.b16 %v271, %v268
    %v347 = vpack.c.b16 %v272, %v269
    %v348 = vpack.c.b16 %v276, %v273
    %v349 = vpack.c.b16 %v277, %v274
    %v350 = vpack.c.b16 %v278, %v275
    %v351 = vpack.c.b16 %v282, %v279
    %v352 = vpack.c.b16 %v283, %v280
    %v353 = vpack.c.b16 %v284, %v281
    %v354 = vpack.c.b16 %v288, %v285
    %v355 = vpack.c.b16 %v289, %v286
    %v356 = vpack.c.b16 %v290, %v287
    %v357 = vpack.c.b16 %v294, %v291
    %v358 = vpack.c.b16 %v295, %v292
    %v359 = vpack.c.b16 %v296, %v293
    %v360 = vpack.c.b16 %v300, %v297
    %v361 = vpack.c.b16 %v301, %v298
    %v362 = vpack.c.b16 %v302, %v299
    %v363 = vpack.c.b16 %v306, %v303
    %v364 = vpack.c.b16 %v307, %v304
    %v365 = vpack.c.b16 %v308, %v305
    %v366 = vpack.c.b16 %v312, %v309
    %v367 = vpack.c.b16 %v313, %v310
    %v368 = vpack.c.b16 %v314, %v311
    %v369 = vpack.c.b16 %v318, %v315
    %v370 = vpack.c.b16 %v319, %v316
    %v371 = vpack.c.b16 %v320, %v317
    %v372 = vpack.c.b16 %v324, %v321
    %v373 = vpack.c.b16 %v325, %v322
    %v374 = vpack.c.b16 %v326, %v323
    %423 = vmatprep.subr.bf16.mxu0 %v328
    %424 = vmatpush1.bf16.msra.mxu0 %v327
    %425 = vmatprep.subr.bf16.mxu0 %v331
    %426 = vmatpush1.bf16.msra.mxu0 %v330
    %427 = vmatprep.subr.bf16.mxu0 %v334
    %428 = vmatpush1.bf16.msra.mxu0 %v333
    %429 = vmatprep.subr.bf16.mxu0 %v337
    %430 = vmatpush1.bf16.msra.mxu0 %v336
    %431 = vmatprep.subr.bf16.mxu0 %v340
    %432 = vmatpush1.bf16.msra.mxu0 %v339
    %433 = vmatprep.subr.bf16.mxu0 %v343
    %434 = vmatpush1.bf16.msra.mxu0 %v342
    %435 = vmatprep.subr.bf16.mxu0 %v346
    %436 = vmatpush1.bf16.msra.mxu0 %v345
    %437 = vmatprep.subr.bf16.mxu0 %v349
    %438 = vmatpush1.bf16.msra.mxu0 %v348
    %439 = vmatprep.subr.bf16.mxu0 %v352
    %440 = vmatpush1.bf16.msra.mxu0 %v351
    %441 = vmatprep.subr.bf16.mxu0 %v355
    %442 = vmatpush1.bf16.msra.mxu0 %v354
    %443 = vmatprep.subr.bf16.mxu0 %v358
    %444 = vmatpush1.bf16.msra.mxu0 %v357
    %445 = vmatprep.subr.bf16.mxu0 %v361
    %446 = vmatpush1.bf16.msra.mxu0 %v360
    %447 = vmatprep.subr.bf16.mxu0 %v364
    %448 = vmatpush1.bf16.msra.mxu0 %v363
    %449 = vmatprep.subr.bf16.mxu0 %v367
    %450 = vmatpush1.bf16.msra.mxu0 %v366
    %451 = vmatprep.subr.bf16.mxu0 %v370
    %452 = vmatpush1.bf16.msra.mxu0 %v369
    %453 = vmatprep.subr.bf16.mxu0 %v373
    %454 = vmatpush1.bf16.msra.mxu0 %v372
    %455 = vmatprep.mubr.bf16.mxu0 %v164
    %456 = vmatmul.mubr.bf16.gmra.mrb[0].mxu0 %v163
    %v457 = vpop.f32.mrb[0].mxu0
    %v458 = vadd.f32 0.0, %v457
    %v459 = vpop.f32.mrb[0].mxu0
    %v460 = vadd.f32 0.0, %v459
    %v461 = vpop.f32.mrb[0].mxu0
    %v462 = vadd.f32 0.0, %v461
    %v463 = vpop.f32.mrb[0].mxu0
    %v464 = vadd.f32 0.0, %v463
    %465 = vdwg.mxu0
    %466 = vmatprep.subr.bf16.mxu0 0
    %467 = vmatpush1.bf16.msra.mxu0 %v329
    %468 = vmatprep.subr.bf16.mxu0 0
    %469 = vmatpush1.bf16.msra.mxu0 %v332
    %470 = vmatprep.subr.bf16.mxu0 0
    %471 = vmatpush1.bf16.msra.mxu0 %v335
    %472 = vmatprep.subr.bf16.mxu0 0
    %473 = vmatpush1.bf16.msra.mxu0 %v338
    %474 = vmatprep.subr.bf16.mxu0 0
    %475 = vmatpush1.bf16.msra.mxu0 %v341
    %476 = vmatprep.subr.bf16.mxu0 0
    %477 = vmatpush1.bf16.msra.mxu0 %v344
    %478 = vmatprep.subr.bf16.mxu0 0
    %479 = vmatpush1.bf16.msra.mxu0 %v347
    %480 = vmatprep.subr.bf16.mxu0 0
    %481 = vmatpush1.bf16.msra.mxu0 %v350
    %482 = vmatprep.subr.bf16.mxu0 0
    %483 = vmatpush1.bf16.msra.mxu0 %v353
    %484 = vmatprep.subr.bf16.mxu0 0
    %485 = vmatpush1.bf16.msra.mxu0 %v356
    %486 = vmatprep.subr.bf16.mxu0 0
    %487 = vmatpush1.bf16.msra.mxu0 %v359
    %488 = vmatprep.subr.bf16.mxu0 0
    %489 = vmatpush1.bf16.msra.mxu0 %v362
    %490 = vmatprep.subr.bf16.mxu0 0
    %491 = vmatpush1.bf16.msra.mxu0 %v365
    %492 = vmatprep.subr.bf16.mxu0 0
    %493 = vmatpush1.bf16.msra.mxu0 %v368
    %494 = vmatprep.subr.bf16.mxu0 0
    %495 = vmatpush1.bf16.msra.mxu0 %v371
    %496 = vmatprep.subr.bf16.mxu0 0
    %497 = vmatpush1.bf16.msra.mxu0 %v374
    %498 = vmatprep.mubr.bf16.mxu0 %v164
    %499 = vmatmul.mubr.bf16.gmra.mrb[0].mxu0 %v163
    %v500 = vpop.f32.mrb[0].mxu0
    %v501 = vadd.f32 0.0, %v500
    %v502 = vpop.f32.mrb[0].mxu0
    %v503 = vpop.f32.mrb[0].mxu0
    %v504 = vadd.f32 0.0, %v503
    %v505 = vpop.f32.mrb[0].mxu0
    %506 = vdwg.mxu0
    %v507 = vld [vmem:[%s6] ss:$8 sm:$0x7]
    %s508 = scalar_lea.vmem %s6, 1
    %v509 = vld [vmem:[%s508] ss:$8 sm:$0x7]
    %v510 = vmul.f32 %v458, %v89
    %v511 = vmul.f32 %v460, %v89
    %v512 = vmul.f32 %v501, %v89
    %v513 = vmul.f32 %v462, %v90
    %v514 = vmul.f32 %v464, %v90
    %v515 = vmul.f32 %v504, %v90
    %v516 = vadd.f32 %v510, %v513
    %v517 = vrot.slane %v516, 4
    %v518 = vadd.f32 %v516, %v517
    %v519 = vrot.slane %v518, 2
    %v520 = vadd.f32 %v518, %v519
    %v521 = vrot.slane %v520, 1
    %v522 = vadd.f32 %v520, %v521
    %v523 = vadd.f32 %v511, %v514
    %v524 = vrot.slane %v523, 4
    %v525 = vadd.f32 %v523, %v524
    %v526 = vrot.slane %v525, 2
    %v527 = vadd.f32 %v525, %v526
    %v528 = vrot.slane %v527, 1
    %v529 = vadd.f32 %v527, %v528
    %v530 = vadd.f32 %v512, %v515
    %v531 = vrot.slane %v530, 4
    %v532 = vadd.f32 %v530, %v531
    %v533 = vrot.slane %v532, 2
    %v534 = vadd.f32 %v532, %v533
    %v535 = vrot.slane %v534, 1
    %v536 = vadd.f32 %v534, %v535
    %v537 = vmul.f32 %v522, 0.25
    %v538 = vmul.f32 %v529, 0.25
    %v539 = vmul.f32 %v536, 0.25
    %v540 = vmul.f32 %v510, %v510
    %v541 = vmul.f32 %v511, %v511
    %v542 = vmul.f32 %v512, %v512
    %v543 = vmul.f32 %v513, %v513
    %v544 = vmul.f32 %v514, %v514
    %v545 = vmul.f32 %v515, %v515
    %v546 = vadd.f32 %v540, %v543
    %v547 = vrot.slane %v546, 4
    %v548 = vadd.f32 %v546, %v547
    %v549 = vrot.slane %v548, 2
    %v550 = vadd.f32 %v548, %v549
    %v551 = vrot.slane %v550, 1
    %v552 = vadd.f32 %v550, %v551
    %v553 = vadd.f32 %v541, %v544
    %v554 = vrot.slane %v553, 4
    %v555 = vadd.f32 %v553, %v554
    %v556 = vrot.slane %v555, 2
    %v557 = vadd.f32 %v555, %v556
    %v558 = vrot.slane %v557, 1
    %v559 = vadd.f32 %v557, %v558
    %v560 = vadd.f32 %v542, %v545
    %v561 = vrot.slane %v560, 4
    %v562 = vadd.f32 %v560, %v561
    %v563 = vrot.slane %v562, 2
    %v564 = vadd.f32 %v562, %v563
    %v565 = vrot.slane %v564, 1
    %v566 = vadd.f32 %v564, %v565
    %v567 = vmul.f32 %v552, 0.25
    %v568 = vmul.f32 %v559, 0.25
    %v569 = vmul.f32 %v566, 0.25
    %v570 = vmul.f32 %v537, %v537
    %v571 = vmul.f32 %v538, %v538
    %v572 = vmul.f32 %v539, %v539
    %v573 = vsub.f32 %v567, %v570
    %v574 = vsub.f32 %v568, %v571
    %v575 = vsub.f32 %v569, %v572
    %v576 = vmax.f32 %v573, 0.0
    %v577 = vmax.f32 %v574, 0.0
    %v578 = vmax.f32 %v575, 0.0
    %v579 = vadd.f32 %v576, 1e-05
    %v580 = vadd.f32 %v577, 1e-05
    %v581 = vadd.f32 %v578, 1e-05
    %v582 = vrsqrt.pop %v579
    %v583 = vrsqrt.pop %v580
    %v584 = vrsqrt.pop %v581
    %v586 = vlaneseq
    %v587 = vshrl.u32 %v586, 7
    %v588 = vsub.s32 0, %v587
    %v589 = vrot.slane %v507, %v588
    %v590 = vlaneseq
    %v591 = vshrl.u32 %v590, 7
    %v592 = vsub.s32 1, %v591
    %v593 = vrot.slane %v507, %v592
    %v594 = vlaneseq
    %v595 = vshrl.u32 %v594, 7
    %v596 = vsub.s32 2, %v595
    %v597 = vrot.slane %v507, %v596
    %v601 = vmul.f32 %v582, %v589
    %v602 = vmul.f32 %v583, %v593
    %v603 = vmul.f32 %v584, %v597
    %v604 = vmul.f32 %v537, %v601
    %v605 = vmul.f32 %v538, %v602
    %v606 = vmul.f32 %v539, %v603
    %v610 = vcombine.low %v604, %v605
    %v612 = vunpack.c.l.s4 1966171168
    %v613 = vunpack.c.0.s8 %v612
    %v614 = vlaneseq
    %v615 = vshrl.u32 %v614, 7
    %v616 = vsub.s32 %v613, %v615
    %v617 = vrot.slane %v610, %v616
    %v619 = vunpack.c.l.s4 1966171168
    %v620 = vunpack.c.0.s8 %v619
    %v621 = vlaneseq
    %v622 = vshrl.u32 %v621, 7
    %v623 = vsub.s32 %v620, %v622
    %v624 = vrot.slane %v606, %v623
    %v625 = vcombine.low %v617, %v624
    %v627 = vunpack.c.l.s4 1966171168
    %v628 = vunpack.c.0.s8 %v627
    %v629 = vlaneseq
    %v630 = vshrl.u32 %v629, 7
    %v631 = vsub.s32 %v628, %v630
    %v632 = vrot.slane %v625, %v631
    %v634 = vsub.f32 %v509, %v632
    %v635 = vlaneseq
    %v636 = vshrl.u32 %v635, 7
    %v637 = vsub.s32 0, %v636
    %v638 = vrot.slane %v601, %v637
    %v639 = vlaneseq
    %v640 = vshrl.u32 %v639, 7
    %v641 = vsub.s32 0, %v640
    %v642 = vrot.slane %v602, %v641
    %v643 = vlaneseq
    %v644 = vshrl.u32 %v643, 7
    %v645 = vsub.s32 0, %v644
    %v646 = vrot.slane %v603, %v645
    %v647 = vmul.f32 %v458, %v638
    %v648 = vmul.f32 %v460, %v642
    %v649 = vmul.f32 %v501, %v646
    %v650 = vmul.f32 %v462, %v638
    %v651 = vmul.f32 %v464, %v642
    %v652 = vmul.f32 %v504, %v646
    %v654 = vlaneseq
    %v655 = vshrl.u32 %v654, 7
    %v656 = vsub.s32 0, %v655
    %v657 = vrot.slane %v634, %v656
    %v658 = vlaneseq
    %v659 = vshrl.u32 %v658, 7
    %v660 = vsub.s32 1, %v659
    %v661 = vrot.slane %v634, %v660
    %v662 = vlaneseq
    %v663 = vshrl.u32 %v662, 7
    %v664 = vsub.s32 2, %v663
    %v665 = vrot.slane %v634, %v664
    %v669 = vadd.f32 %v647, %v657
    %v670 = vadd.f32 %v648, %v661
    %v671 = vadd.f32 %v649, %v665
    %v672 = vadd.f32 %v650, %v657
    %v673 = vadd.f32 %v651, %v661
    %v674 = vadd.f32 %v652, %v665
    %v675 = vmul.f32 %v669, 0.2
    %v676 = vmul.f32 %v670, 0.2
    %v677 = vmul.f32 %v671, 0.2
    %v678 = vmul.f32 %v672, 0.2
    %v679 = vmul.f32 %v673, 0.2
    %v680 = vmul.f32 %v674, 0.2
    %v681 = vmax.f32 %v669, %v675
    %v682 = vmax.f32 %v670, %v676
    %v683 = vmax.f32 %v671, %v677
    %v684 = vmax.f32 %v672, %v678
    %v685 = vmax.f32 %v673, %v679
    %v686 = vmax.f32 %v674, %v680
    %v687 = vpack.c.bf16 %v684, %v681
    %v688 = vpack.c.bf16 %v685, %v682
    %v689 = vpack.c.bf16 %v686, %v683
    %v690 = vld [vmem:[#allocation4] sm:$0xf]
    %v691 = vld [vmem:[#allocation4 + $0x4] sm:$0xf]
    %v692 = vld [vmem:[#allocation4 + $0x8] sm:$0xf]
    %v693 = vld [vmem:[#allocation4 + $0xc] sm:$0xf]
    %v694 = vld [vmem:[#allocation4 + $0x10] sm:$0xf]
    %v695 = vld [vmem:[#allocation4 + $0x14] sm:$0xf]
    %v696 = vld [vmem:[#allocation4 + $0x18] sm:$0xf]
    %v697 = vld [vmem:[#allocation4 + $0x1c] sm:$0xf]
    %v698 = vld [vmem:[#allocation4 + $0x20] sm:$0xf]
    %v699 = vld [vmem:[#allocation4 + $0x24] sm:$0xf]
    %v700 = vld [vmem:[#allocation4 + $0x28] sm:$0xf]
    %v701 = vld [vmem:[#allocation4 + $0x2c] sm:$0xf]
    %v702 = vld [vmem:[#allocation4 + $0x30] sm:$0xf]
    %v703 = vld [vmem:[#allocation4 + $0x34] sm:$0xf]
    %v704 = vld [vmem:[#allocation4 + $0x38] sm:$0xf]
    %v705 = vld [vmem:[#allocation4 + $0x3c] sm:$0xf]
    %v706 = vld [vmem:[#allocation4 + $0x40] sm:$0xf]
    %v707 = vld [vmem:[#allocation4 + $0x44] sm:$0xf]
    %v708 = vld [vmem:[#allocation4 + $0x48] sm:$0xf]
    %v709 = vld [vmem:[#allocation4 + $0x4c] sm:$0xf]
    %v710 = vld [vmem:[#allocation4 + $0x50] sm:$0xf]
    %v711 = vld [vmem:[#allocation4 + $0x54] sm:$0xf]
    %v712 = vld [vmem:[#allocation4 + $0x58] sm:$0xf]
    %v713 = vld [vmem:[#allocation4 + $0x5c] sm:$0xf]
    %v714 = vld [vmem:[#allocation4 + $0x60] sm:$0xf]
    %v715 = vld [vmem:[#allocation4 + $0x64] sm:$0xf]
    %v716 = vld [vmem:[#allocation4 + $0x68] sm:$0xf]
    %v717 = vld [vmem:[#allocation4 + $0x6c] sm:$0xf]
    %v718 = vld [vmem:[#allocation4 + $0x70] sm:$0xf]
    %v719 = vld [vmem:[#allocation4 + $0x74] sm:$0xf]
    %v720 = vld [vmem:[#allocation4 + $0x78] sm:$0xf]
    %v721 = vld [vmem:[#allocation4 + $0x7c] sm:$0xf]
    %v722 = vld [vmem:[#allocation4 + $0x80] sm:$0xf]
    %v723 = vld [vmem:[#allocation4 + $0x84] sm:$0xf]
    %v724 = vld [vmem:[#allocation4 + $0x88] sm:$0xf]
    %v725 = vld [vmem:[#allocation4 + $0x8c] sm:$0xf]
    %v726 = vld [vmem:[#allocation4 + $0x90] sm:$0xf]
    %v727 = vld [vmem:[#allocation4 + $0x94] sm:$0xf]
    %v728 = vld [vmem:[#allocation4 + $0x98] sm:$0xf]
    %v729 = vld [vmem:[#allocation4 + $0x9c] sm:$0xf]
    %v730 = vld [vmem:[#allocation4 + $0xa0] sm:$0xf]
    %v731 = vld [vmem:[#allocation4 + $0xa4] sm:$0xf]
    %v732 = vld [vmem:[#allocation4 + $0xa8] sm:$0xf]
    %v733 = vld [vmem:[#allocation4 + $0xac] sm:$0xf]
    %v734 = vld [vmem:[#allocation4 + $0xb0] sm:$0xf]
    %v735 = vld [vmem:[#allocation4 + $0xb4] sm:$0xf]
    %v736 = vld [vmem:[#allocation4 + $0xb8] sm:$0xf]
    %v737 = vld [vmem:[#allocation4 + $0xbc] sm:$0xf]
    %v738 = vld [vmem:[%s6 + $0x4] ss:$0 sm:$0xff]
    %v787 = vunpack.c.l.b16 %v690
    %v788 = vunpack.c.l.b16 %v691
    %v789 = vunpack.c.l.b16 %v692
    %v790 = vunpack.c.l.b16 %v693
    %v791 = vunpack.c.l.b16 %v694
    %v792 = vunpack.c.l.b16 %v695
    %v793 = vunpack.c.l.b16 %v696
    %v794 = vunpack.c.l.b16 %v697
    %v795 = vunpack.c.l.b16 %v698
    %v796 = vunpack.c.l.b16 %v699
    %v797 = vunpack.c.l.b16 %v700
    %v798 = vunpack.c.l.b16 %v701
    %v799 = vunpack.c.l.b16 %v702
    %v800 = vunpack.c.l.b16 %v703
    %v801 = vunpack.c.l.b16 %v704
    %v802 = vunpack.c.l.b16 %v705
    %v803 = vunpack.c.l.b16 %v706
    %v804 = vunpack.c.l.b16 %v707
    %v805 = vunpack.c.l.b16 %v708
    %v806 = vunpack.c.l.b16 %v709
    %v807 = vunpack.c.l.b16 %v710
    %v808 = vunpack.c.l.b16 %v711
    %v809 = vunpack.c.l.b16 %v712
    %v810 = vunpack.c.l.b16 %v713
    %v811 = vunpack.c.l.b16 %v714
    %v812 = vunpack.c.l.b16 %v715
    %v813 = vunpack.c.l.b16 %v716
    %v814 = vunpack.c.l.b16 %v717
    %v815 = vunpack.c.l.b16 %v718
    %v816 = vunpack.c.l.b16 %v719
    %v817 = vunpack.c.l.b16 %v720
    %v818 = vunpack.c.l.b16 %v721
    %v819 = vunpack.c.l.b16 %v722
    %v820 = vunpack.c.l.b16 %v723
    %v821 = vunpack.c.l.b16 %v724
    %v822 = vunpack.c.l.b16 %v725
    %v823 = vunpack.c.l.b16 %v726
    %v824 = vunpack.c.l.b16 %v727
    %v825 = vunpack.c.l.b16 %v728
    %v826 = vunpack.c.l.b16 %v729
    %v827 = vunpack.c.l.b16 %v730
    %v828 = vunpack.c.l.b16 %v731
    %v829 = vunpack.c.l.b16 %v732
    %v830 = vunpack.c.l.b16 %v733
    %v831 = vunpack.c.l.b16 %v734
    %v832 = vunpack.c.l.b16 %v735
    %v833 = vunpack.c.l.b16 %v736
    %v834 = vunpack.c.l.b16 %v737
    %v835 = vpack.c.b16 %v788, %v787
    %v836 = vpack.c.b16 %v790, %v789
    %v837 = vpack.c.b16 %v792, %v791
    %v838 = vpack.c.b16 %v794, %v793
    %v839 = vpack.c.b16 %v796, %v795
    %v840 = vpack.c.b16 %v798, %v797
    %v841 = vpack.c.b16 %v800, %v799
    %v842 = vpack.c.b16 %v802, %v801
    %v843 = vpack.c.b16 %v804, %v803
    %v844 = vpack.c.b16 %v806, %v805
    %v845 = vpack.c.b16 %v808, %v807
    %v846 = vpack.c.b16 %v810, %v809
    %v847 = vpack.c.b16 %v812, %v811
    %v848 = vpack.c.b16 %v814, %v813
    %v849 = vpack.c.b16 %v816, %v815
    %v850 = vpack.c.b16 %v818, %v817
    %v851 = vpack.c.b16 %v820, %v819
    %v852 = vpack.c.b16 %v822, %v821
    %v853 = vpack.c.b16 %v824, %v823
    %v854 = vpack.c.b16 %v826, %v825
    %v855 = vpack.c.b16 %v828, %v827
    %v856 = vpack.c.b16 %v830, %v829
    %v857 = vpack.c.b16 %v832, %v831
    %v858 = vpack.c.b16 %v834, %v833
    %883 = vmatprep.subr.bf16.mxu0 0
    %884 = vmatpush1.bf16.msra.mxu0 %v835
    %885 = vmatprep.subr.bf16.mxu0 0
    %886 = vmatpush1.bf16.msra.mxu0 %v836
    %887 = vmatprep.subr.bf16.mxu0 0
    %888 = vmatpush1.bf16.msra.mxu0 %v837
    %889 = vmatprep.subr.bf16.mxu0 0
    %890 = vmatpush1.bf16.msra.mxu0 %v838
    %891 = vmatprep.subr.bf16.mxu0 0
    %892 = vmatpush1.bf16.msra.mxu0 %v839
    %893 = vmatprep.subr.bf16.mxu0 0
    %894 = vmatpush1.bf16.msra.mxu0 %v840
    %895 = vmatprep.subr.bf16.mxu0 0
    %896 = vmatpush1.bf16.msra.mxu0 %v841
    %897 = vmatprep.subr.bf16.mxu0 0
    %898 = vmatpush1.bf16.msra.mxu0 %v842
    %899 = vmatprep.subr.bf16.mxu0 0
    %900 = vmatpush1.bf16.msra.mxu0 %v843
    %901 = vmatprep.subr.bf16.mxu0 0
    %902 = vmatpush1.bf16.msra.mxu0 %v844
    %903 = vmatprep.subr.bf16.mxu0 0
    %904 = vmatpush1.bf16.msra.mxu0 %v845
    %905 = vmatprep.subr.bf16.mxu0 0
    %906 = vmatpush1.bf16.msra.mxu0 %v846
    %907 = vmatprep.subr.bf16.mxu0 0
    %908 = vmatpush1.bf16.msra.mxu0 %v847
    %909 = vmatprep.subr.bf16.mxu0 0
    %910 = vmatpush1.bf16.msra.mxu0 %v848
    %911 = vmatprep.subr.bf16.mxu0 0
    %912 = vmatpush1.bf16.msra.mxu0 %v849
    %913 = vmatprep.subr.bf16.mxu0 0
    %914 = vmatpush1.bf16.msra.mxu0 %v850
    %915 = vmatprep.mubr.bf16.mxu0 %v688
    %916 = vmatmul.mubr.bf16.gmra.mrb[0].mxu0 %v687
    %v917 = vpop.f32.mrb[0].mxu0
    %v918 = vadd.f32 %v738, %v917
    %v919 = vpop.f32.mrb[0].mxu0
    %v920 = vpop.f32.mrb[0].mxu0
    %v921 = vadd.f32 %v738, %v920
    %v922 = vpop.f32.mrb[0].mxu0
    %923 = vdwg.mxu0
    %924 = vmatprep.subr.bf16.mxu0 0
    %925 = vmatpush1.bf16.msra.mxu0 %v851
    %926 = vmatprep.subr.bf16.mxu0 0
    %927 = vmatpush1.bf16.msra.mxu0 %v852
    %928 = vmatprep.subr.bf16.mxu0 0
    %929 = vmatpush1.bf16.msra.mxu0 %v853
    %930 = vmatprep.subr.bf16.mxu0 0
    %931 = vmatpush1.bf16.msra.mxu0 %v854
    %932 = vmatprep.subr.bf16.mxu0 0
    %933 = vmatpush1.bf16.msra.mxu0 %v855
    %934 = vmatprep.subr.bf16.mxu0 0
    %935 = vmatpush1.bf16.msra.mxu0 %v856
    %936 = vmatprep.subr.bf16.mxu0 0
    %937 = vmatpush1.bf16.msra.mxu0 %v857
    %938 = vmatprep.subr.bf16.mxu0 0
    %939 = vmatpush1.bf16.msra.mxu0 %v858
    %940 = vmatprep.subr.bf16.mxu0 0
    %941 = vmatpush1.bf16.msra.mxu0 0
    %942 = vmatprep.subr.bf16.mxu0 0
    %943 = vmatpush1.bf16.msra.mxu0 0
    %944 = vmatprep.subr.bf16.mxu0 0
    %945 = vmatpush1.bf16.msra.mxu0 0
    %946 = vmatprep.subr.bf16.mxu0 0
    %947 = vmatpush1.bf16.msra.mxu0 0
    %948 = vmatprep.subr.bf16.mxu0 0
    %949 = vmatpush1.bf16.msra.mxu0 0
    %950 = vmatprep.subr.bf16.mxu0 0
    %951 = vmatpush1.bf16.msra.mxu0 0
    %952 = vmatprep.subr.bf16.mxu0 0
    %953 = vmatpush1.bf16.msra.mxu0 0
    %954 = vmatprep.subr.bf16.mxu0 0
    %955 = vmatpush1.bf16.msra.mxu0 0
    %956 = vmatprep.mubr.bf16.mxu0 0
    %957 = vmatmul.mubr.bf16.gmra.mrb[0].mxu0 %v689
    %v958 = vpop.f32.mrb[0].mxu0
    %v959 = vadd.f32 %v918, %v958
    %v960 = vpop.f32.mrb[0].mxu0
    %v961 = vpop.f32.mrb[0].mxu0
    %v962 = vadd.f32 %v921, %v961
    %v963 = vpop.f32.mrb[0].mxu0
    %964 = vdwg.mxu0
    %v965 = vld [vmem:[%s1] sm:$0xff]
    %v966 = vld [vmem:[%s1 + $0x8] sm:$0xff]
    %v967 = vmul.f32 %v959, 0.5
    %v968 = vmul.f32 %v962, 0.5
    %v969 = vmul.f32 %v967, 1.442695
    %v970 = vpow.pop %v969
    %v971 = vmul.f32 %v968, 1.442695
    %v972 = vpow.pop %v971
    %975 = vrot.lane.b32.xlu0 %v970, 64
    %v976 = vpop.permute.xlu0 %975
    %977 = vrot.lane.b32.xlu0 %v972, 64
    %v978 = vpop.permute.xlu0 %977
    %v981 = vmul.f32 %v965, %v976
    %v982 = vmul.f32 %v966, %v978
    %v983 = vadd.f32 %v981, %v959
    %v984 = vadd.f32 %v982, %v962
    %v985 = vpack.c.bf16 %v984, %v983
    %v986 = vld [vmem:[#allocation6] sm:$0xff]
    %v987 = vld [vmem:[#allocation6 + $0x8] sm:$0xf]
    %v988 = vld [vmem:[#allocation6 + $0xc] sm:$0xff]
    %v989 = vld [vmem:[#allocation6 + $0x14] sm:$0xf]
    %v990 = vld [vmem:[#allocation6 + $0x18] sm:$0xff]
    %v991 = vld [vmem:[#allocation6 + $0x20] sm:$0xf]
    %v992 = vld [vmem:[#allocation6 + $0x24] sm:$0xff]
    %v993 = vld [vmem:[#allocation6 + $0x2c] sm:$0xf]
    %v994 = vld [vmem:[#allocation6 + $0x30] sm:$0xff]
    %v995 = vld [vmem:[#allocation6 + $0x38] sm:$0xf]
    %v996 = vld [vmem:[#allocation6 + $0x3c] sm:$0xff]
    %v997 = vld [vmem:[#allocation6 + $0x44] sm:$0xf]
    %v998 = vld [vmem:[#allocation6 + $0x48] sm:$0xff]
    %v999 = vld [vmem:[#allocation6 + $0x50] sm:$0xf]
    %v1000 = vld [vmem:[#allocation6 + $0x54] sm:$0xff]
    %v1001 = vld [vmem:[#allocation6 + $0x5c] sm:$0xf]
    %v1018 = vunpack.c.l.b16 %v986
    %v1019 = vunpack.c.h.b16 %v986
    %v1020 = vunpack.c.l.b16 %v987
    %v1021 = vunpack.c.l.b16 %v988
    %v1022 = vunpack.c.h.b16 %v988
    %v1023 = vunpack.c.l.b16 %v989
    %v1024 = vunpack.c.l.b16 %v990
    %v1025 = vunpack.c.h.b16 %v990
    %v1026 = vunpack.c.l.b16 %v991
    %v1027 = vunpack.c.l.b16 %v992
    %v1028 = vunpack.c.h.b16 %v992
    %v1029 = vunpack.c.l.b16 %v993
    %v1030 = vunpack.c.l.b16 %v994
    %v1031 = vunpack.c.h.b16 %v994
    %v1032 = vunpack.c.l.b16 %v995
    %v1033 = vunpack.c.l.b16 %v996
    %v1034 = vunpack.c.h.b16 %v996
    %v1035 = vunpack.c.l.b16 %v997
    %v1036 = vunpack.c.l.b16 %v998
    %v1037 = vunpack.c.h.b16 %v998
    %v1038 = vunpack.c.l.b16 %v999
    %v1039 = vunpack.c.l.b16 %v1000
    %v1040 = vunpack.c.h.b16 %v1000
    %v1041 = vunpack.c.l.b16 %v1001
    %v1042 = vpack.c.b16 %v1021, %v1018
    %v1043 = vpack.c.b16 %v1022, %v1019
    %v1044 = vpack.c.b16 %v1023, %v1020
    %v1045 = vpack.c.b16 %v1027, %v1024
    %v1046 = vpack.c.b16 %v1028, %v1025
    %v1047 = vpack.c.b16 %v1029, %v1026
    %v1048 = vpack.c.b16 %v1033, %v1030
    %v1049 = vpack.c.b16 %v1034, %v1031
    %v1050 = vpack.c.b16 %v1035, %v1032
    %v1051 = vpack.c.b16 %v1039, %v1036
    %v1052 = vpack.c.b16 %v1040, %v1037
    %v1053 = vpack.c.b16 %v1041, %v1038
    %vm1066 = vcmask 523264
    %v1068 = vsel %vm1066, %v985, 0
    %1070 = vmatprep.subr.bf16.mxu0 %v1043
    %1071 = vmatpush1.bf16.msra.mxu0 %v1042
    %1072 = vmatprep.subr.bf16.mxu0 %v1046
    %1073 = vmatpush1.bf16.msra.mxu0 %v1045
    %1074 = vmatprep.subr.bf16.mxu0 %v1049
    %1075 = vmatpush1.bf16.msra.mxu0 %v1048
    %1076 = vmatprep.subr.bf16.mxu0 %v1052
    %1077 = vmatpush1.bf16.msra.mxu0 %v1051
    %1078 = vmatprep.subr.bf16.mxu0 0
    %1079 = vmatpush1.bf16.msra.mxu0 0
    %1080 = vmatprep.subr.bf16.mxu0 0
    %1081 = vmatpush1.bf16.msra.mxu0 0
    %1082 = vmatprep.subr.bf16.mxu0 0
    %1083 = vmatpush1.bf16.msra.mxu0 0
    %1084 = vmatprep.subr.bf16.mxu0 0
    %1085 = vmatpush1.bf16.msra.mxu0 0
    %1086 = vmatprep.subr.bf16.mxu0 0
    %1087 = vmatpush1.bf16.msra.mxu0 0
    %1088 = vmatprep.subr.bf16.mxu0 0
    %1089 = vmatpush1.bf16.msra.mxu0 0
    %1090 = vmatprep.subr.bf16.mxu0 0
    %1091 = vmatpush1.bf16.msra.mxu0 0
    %1092 = vmatprep.subr.bf16.mxu0 0
    %1093 = vmatpush1.bf16.msra.mxu0 0
    %1094 = vmatprep.subr.bf16.mxu0 0
    %1095 = vmatpush1.bf16.msra.mxu0 0
    %1096 = vmatprep.subr.bf16.mxu0 0
    %1097 = vmatpush1.bf16.msra.mxu0 0
    %1098 = vmatprep.subr.bf16.mxu0 0
    %1099 = vmatpush1.bf16.msra.mxu0 0
    %1100 = vmatprep.subr.bf16.mxu0 0
    %1101 = vmatpush1.bf16.msra.mxu0 0
    %1102 = vmatprep.mubr.bf16.mxu0 0
    %1103 = vmatmul.mubr.bf16.gmra.mrb[0].mxu0 %v1068
    %v1104 = vpop.f32.mrb[0].mxu0
    %v1105 = vadd.f32 0.0, %v1104
    %v1106 = vpop.f32.mrb[0].mxu0
    %v1107 = vadd.f32 0.0, %v1106
    %v1108 = vpop.f32.mrb[0].mxu0
    %v1109 = vadd.f32 0.0, %v1108
    %v1110 = vpop.f32.mrb[0].mxu0
    %v1111 = vadd.f32 0.0, %v1110
    %1112 = vdwg.mxu0
    %1113 = vmatprep.subr.bf16.mxu0 0
    %1114 = vmatpush1.bf16.msra.mxu0 %v1044
    %1115 = vmatprep.subr.bf16.mxu0 0
    %1116 = vmatpush1.bf16.msra.mxu0 %v1047
    %1117 = vmatprep.subr.bf16.mxu0 0
    %1118 = vmatpush1.bf16.msra.mxu0 %v1050
    %1119 = vmatprep.subr.bf16.mxu0 0
    %1120 = vmatpush1.bf16.msra.mxu0 %v1053
    %1121 = vmatprep.subr.bf16.mxu0 0
    %1122 = vmatpush1.bf16.msra.mxu0 0
    %1123 = vmatprep.subr.bf16.mxu0 0
    %1124 = vmatpush1.bf16.msra.mxu0 0
    %1125 = vmatprep.subr.bf16.mxu0 0
    %1126 = vmatpush1.bf16.msra.mxu0 0
    %1127 = vmatprep.subr.bf16.mxu0 0
    %1128 = vmatpush1.bf16.msra.mxu0 0
    %1129 = vmatprep.subr.bf16.mxu0 0
    %1130 = vmatpush1.bf16.msra.mxu0 0
    %1131 = vmatprep.subr.bf16.mxu0 0
    %1132 = vmatpush1.bf16.msra.mxu0 0
    %1133 = vmatprep.subr.bf16.mxu0 0
    %1134 = vmatpush1.bf16.msra.mxu0 0
    %1135 = vmatprep.subr.bf16.mxu0 0
    %1136 = vmatpush1.bf16.msra.mxu0 0
    %1137 = vmatprep.subr.bf16.mxu0 0
    %1138 = vmatpush1.bf16.msra.mxu0 0
    %1139 = vmatprep.subr.bf16.mxu0 0
    %1140 = vmatpush1.bf16.msra.mxu0 0
    %1141 = vmatprep.subr.bf16.mxu0 0
    %1142 = vmatpush1.bf16.msra.mxu0 0
    %1143 = vmatprep.subr.bf16.mxu0 0
    %1144 = vmatpush1.bf16.msra.mxu0 0
    %1145 = vmatprep.mubr.bf16.mxu0 0
    %1146 = vmatmul.mubr.bf16.gmra.mrb[0].mxu0 %v1068
    %v1147 = vpop.f32.mrb[0].mxu0
    %v1148 = vadd.f32 0.0, %v1147
    %v1149 = vpop.f32.mrb[0].mxu0
    %v1150 = vpop.f32.mrb[0].mxu0
    %v1151 = vadd.f32 0.0, %v1150
    %v1152 = vpop.f32.mrb[0].mxu0
    %1153 = vdwg.mxu0
    %s1154 = scalar_lea.vmem %s6, 2
    %v1155 = vld [vmem:[%s1154] ss:$8 sm:$0x7]
    %s1156 = scalar_lea.vmem %s6, 3
    %v1157 = vld [vmem:[%s1156] ss:$8 sm:$0x7]
    %v1158 = vmul.f32 %v1105, %v89
    %v1159 = vmul.f32 %v1107, %v89
    %v1160 = vmul.f32 %v1148, %v89
    %v1161 = vmul.f32 %v1109, %v90
    %v1162 = vmul.f32 %v1111, %v90
    %v1163 = vmul.f32 %v1151, %v90
    %v1164 = vadd.f32 %v1158, %v1161
    %v1165 = vrot.slane %v1164, 4
    %v1166 = vadd.f32 %v1164, %v1165
    %v1167 = vrot.slane %v1166, 2
    %v1168 = vadd.f32 %v1166, %v1167
    %v1169 = vrot.slane %v1168, 1
    %v1170 = vadd.f32 %v1168, %v1169
    %v1171 = vadd.f32 %v1159, %v1162
    %v1172 = vrot.slane %v1171, 4
    %v1173 = vadd.f32 %v1171, %v1172
    %v1174 = vrot.slane %v1173, 2
    %v1175 = vadd.f32 %v1173, %v1174
    %v1176 = vrot.slane %v1175, 1
    %v1177 = vadd.f32 %v1175, %v1176
    %v1178 = vadd.f32 %v1160, %v1163
    %v1179 = vrot.slane %v1178, 4
    %v1180 = vadd.f32 %v1178, %v1179
    %v1181 = vrot.slane %v1180, 2
    %v1182 = vadd.f32 %v1180, %v1181
    %v1183 = vrot.slane %v1182, 1
    %v1184 = vadd.f32 %v1182, %v1183
    %v1185 = vmul.f32 %v1170, 0.25
    %v1186 = vmul.f32 %v1177, 0.25
    %v1187 = vmul.f32 %v1184, 0.25
    %v1188 = vmul.f32 %v1158, %v1158
    %v1189 = vmul.f32 %v1159, %v1159
    %v1190 = vmul.f32 %v1160, %v1160
    %v1191 = vmul.f32 %v1161, %v1161
    %v1192 = vmul.f32 %v1162, %v1162
    %v1193 = vmul.f32 %v1163, %v1163
    %v1194 = vadd.f32 %v1188, %v1191
    %v1195 = vrot.slane %v1194, 4
    %v1196 = vadd.f32 %v1194, %v1195
    %v1197 = vrot.slane %v1196, 2
    %v1198 = vadd.f32 %v1196, %v1197
    %v1199 = vrot.slane %v1198, 1
    %v1200 = vadd.f32 %v1198, %v1199
    %v1201 = vadd.f32 %v1189, %v1192
    %v1202 = vrot.slane %v1201, 4
    %v1203 = vadd.f32 %v1201, %v1202
    %v1204 = vrot.slane %v1203, 2
    %v1205 = vadd.f32 %v1203, %v1204
    %v1206 = vrot.slane %v1205, 1
    %v1207 = vadd.f32 %v1205, %v1206
    %v1208 = vadd.f32 %v1190, %v1193
    %v1209 = vrot.slane %v1208, 4
    %v1210 = vadd.f32 %v1208, %v1209
    %v1211 = vrot.slane %v1210, 2
    %v1212 = vadd.f32 %v1210, %v1211
    %v1213 = vrot.slane %v1212, 1
    %v1214 = vadd.f32 %v1212, %v1213
    %v1215 = vmul.f32 %v1200, 0.25
    %v1216 = vmul.f32 %v1207, 0.25
    %v1217 = vmul.f32 %v1214, 0.25
    %v1218 = vmul.f32 %v1185, %v1185
    %v1219 = vmul.f32 %v1186, %v1186
    %v1220 = vmul.f32 %v1187, %v1187
    %v1221 = vsub.f32 %v1215, %v1218
    %v1222 = vsub.f32 %v1216, %v1219
    %v1223 = vsub.f32 %v1217, %v1220
    %v1224 = vmax.f32 %v1221, 0.0
    %v1225 = vmax.f32 %v1222, 0.0
    %v1226 = vmax.f32 %v1223, 0.0
    %v1227 = vadd.f32 %v1224, 1e-05
    %v1228 = vadd.f32 %v1225, 1e-05
    %v1229 = vadd.f32 %v1226, 1e-05
    %v1230 = vrsqrt.pop %v1227
    %v1231 = vrsqrt.pop %v1228
    %v1232 = vrsqrt.pop %v1229
    %v1234 = vlaneseq
    %v1235 = vshrl.u32 %v1234, 7
    %v1236 = vsub.s32 0, %v1235
    %v1237 = vrot.slane %v1155, %v1236
    %v1238 = vlaneseq
    %v1239 = vshrl.u32 %v1238, 7
    %v1240 = vsub.s32 1, %v1239
    %v1241 = vrot.slane %v1155, %v1240
    %v1242 = vlaneseq
    %v1243 = vshrl.u32 %v1242, 7
    %v1244 = vsub.s32 2, %v1243
    %v1245 = vrot.slane %v1155, %v1244
    %v1249 = vmul.f32 %v1230, %v1237
    %v1250 = vmul.f32 %v1231, %v1241
    %v1251 = vmul.f32 %v1232, %v1245
    %v1252 = vmul.f32 %v1185, %v1249
    %v1253 = vmul.f32 %v1186, %v1250
    %v1254 = vmul.f32 %v1187, %v1251
    %v1258 = vcombine.low %v1252, %v1253
    %v1260 = vunpack.c.l.s4 1966171168
    %v1261 = vunpack.c.0.s8 %v1260
    %v1262 = vlaneseq
    %v1263 = vshrl.u32 %v1262, 7
    %v1264 = vsub.s32 %v1261, %v1263
    %v1265 = vrot.slane %v1258, %v1264
    %v1267 = vunpack.c.l.s4 1966171168
    %v1268 = vunpack.c.0.s8 %v1267
    %v1269 = vlaneseq
    %v1270 = vshrl.u32 %v1269, 7
    %v1271 = vsub.s32 %v1268, %v1270
    %v1272 = vrot.slane %v1254, %v1271
    %v1273 = vcombine.low %v1265, %v1272
    %v1275 = vunpack.c.l.s4 1966171168
    %v1276 = vunpack.c.0.s8 %v1275
    %v1277 = vlaneseq
    %v1278 = vshrl.u32 %v1277, 7
    %v1279 = vsub.s32 %v1276, %v1278
    %v1280 = vrot.slane %v1273, %v1279
    %v1282 = vsub.f32 %v1157, %v1280
    %v1283 = vlaneseq
    %v1284 = vshrl.u32 %v1283, 7
    %v1285 = vsub.s32 0, %v1284
    %v1286 = vrot.slane %v1249, %v1285
    %v1287 = vlaneseq
    %v1288 = vshrl.u32 %v1287, 7
    %v1289 = vsub.s32 0, %v1288
    %v1290 = vrot.slane %v1250, %v1289
    %v1291 = vlaneseq
    %v1292 = vshrl.u32 %v1291, 7
    %v1293 = vsub.s32 0, %v1292
    %v1294 = vrot.slane %v1251, %v1293
    %v1295 = vmul.f32 %v1105, %v1286
    %v1296 = vmul.f32 %v1107, %v1290
    %v1297 = vmul.f32 %v1148, %v1294
    %v1298 = vmul.f32 %v1109, %v1286
    %v1299 = vmul.f32 %v1111, %v1290
    %v1300 = vmul.f32 %v1151, %v1294
    %v1302 = vlaneseq
    %v1303 = vshrl.u32 %v1302, 7
    %v1304 = vsub.s32 0, %v1303
    %v1305 = vrot.slane %v1282, %v1304
    %v1306 = vlaneseq
    %v1307 = vshrl.u32 %v1306, 7
    %v1308 = vsub.s32 1, %v1307
    %v1309 = vrot.slane %v1282, %v1308
    %v1310 = vlaneseq
    %v1311 = vshrl.u32 %v1310, 7
    %v1312 = vsub.s32 2, %v1311
    %v1313 = vrot.slane %v1282, %v1312
    %v1317 = vadd.f32 %v1295, %v1305
    %v1318 = vadd.f32 %v1296, %v1309
    %v1319 = vadd.f32 %v1297, %v1313
    %v1320 = vadd.f32 %v1298, %v1305
    %v1321 = vadd.f32 %v1299, %v1309
    %v1322 = vadd.f32 %v1300, %v1313
    %v1323 = vmul.f32 %v1317, 0.2
    %v1324 = vmul.f32 %v1318, 0.2
    %v1325 = vmul.f32 %v1319, 0.2
    %v1326 = vmul.f32 %v1320, 0.2
    %v1327 = vmul.f32 %v1321, 0.2
    %v1328 = vmul.f32 %v1322, 0.2
    %v1329 = vmax.f32 %v1317, %v1323
    %v1330 = vmax.f32 %v1318, %v1324
    %v1331 = vmax.f32 %v1319, %v1325
    %v1332 = vmax.f32 %v1320, %v1326
    %v1333 = vmax.f32 %v1321, %v1327
    %v1334 = vmax.f32 %v1322, %v1328
    %v1335 = vpack.c.bf16 %v1332, %v1329
    %v1336 = vpack.c.bf16 %v1333, %v1330
    %v1337 = vpack.c.bf16 %v1334, %v1331
    %v1338 = vld [vmem:[#allocation7] sm:$0xff]
    %v1339 = vld [vmem:[#allocation7 + $0x8] sm:$0xff]
    %v1340 = vld [vmem:[#allocation7 + $0x10] sm:$0xff]
    %v1341 = vld [vmem:[#allocation7 + $0x18] sm:$0xff]
    %v1342 = vld [vmem:[#allocation7 + $0x20] sm:$0xff]
    %v1343 = vld [vmem:[#allocation7 + $0x28] sm:$0xff]
    %v1344 = vld [vmem:[#allocation7 + $0x30] sm:$0xff]
    %v1345 = vld [vmem:[#allocation7 + $0x38] sm:$0xff]
    %v1346 = vld [vmem:[#allocation7 + $0x40] sm:$0xff]
    %v1347 = vld [vmem:[#allocation7 + $0x48] sm:$0xff]
    %v1348 = vld [vmem:[#allocation7 + $0x50] sm:$0xff]
    %v1349 = vld [vmem:[#allocation7 + $0x58] sm:$0xff]
    %v1350 = vld [vmem:[#allocation7 + $0x60] sm:$0xff]
    %v1351 = vld [vmem:[#allocation7 + $0x68] sm:$0xff]
    %v1352 = vld [vmem:[#allocation7 + $0x70] sm:$0xff]
    %v1353 = vld [vmem:[#allocation7 + $0x78] sm:$0xff]
    %v1354 = vld [vmem:[#allocation7 + $0x80] sm:$0xff]
    %v1355 = vld [vmem:[#allocation7 + $0x88] sm:$0xff]
    %v1356 = vld [vmem:[#allocation7 + $0x90] sm:$0xff]
    %v1357 = vld [vmem:[#allocation7 + $0x98] sm:$0xff]
    %v1358 = vld [vmem:[#allocation7 + $0xa0] sm:$0xff]
    %v1359 = vld [vmem:[#allocation7 + $0xa8] sm:$0xff]
    %v1360 = vld [vmem:[#allocation7 + $0xb0] sm:$0xff]
    %v1361 = vld [vmem:[#allocation7 + $0xb8] sm:$0xff]
    %v1362 = vld [vmem:[#allocation7 + $0xc0] sm:$0xff]
    %v1363 = vld [vmem:[#allocation7 + $0xc8] sm:$0xff]
    %v1364 = vld [vmem:[#allocation7 + $0xd0] sm:$0xff]
    %v1365 = vld [vmem:[#allocation7 + $0xd8] sm:$0xff]
    %v1366 = vld [vmem:[#allocation7 + $0xe0] sm:$0xff]
    %v1367 = vld [vmem:[#allocation7 + $0xe8] sm:$0xff]
    %v1368 = vld [vmem:[#allocation7 + $0xf0] sm:$0xff]
    %v1369 = vld [vmem:[#allocation7 + $0xf8] sm:$0xff]
    %v1370 = vld [vmem:[#allocation7 + $0x100] sm:$0xff]
    %v1371 = vld [vmem:[#allocation7 + $0x108] sm:$0xff]
    %v1372 = vld [vmem:[#allocation7 + $0x110] sm:$0xff]
    %v1373 = vld [vmem:[#allocation7 + $0x118] sm:$0xff]
    %v1374 = vld [vmem:[#allocation7 + $0x120] sm:$0xff]
    %v1375 = vld [vmem:[#allocation7 + $0x128] sm:$0xff]
    %v1376 = vld [vmem:[#allocation7 + $0x130] sm:$0xff]
    %v1377 = vld [vmem:[#allocation7 + $0x138] sm:$0xff]
    %v1378 = vld [vmem:[#allocation7 + $0x140] sm:$0xff]
    %v1379 = vld [vmem:[#allocation7 + $0x148] sm:$0xff]
    %v1380 = vld [vmem:[#allocation7 + $0x150] sm:$0xff]
    %v1381 = vld [vmem:[#allocation7 + $0x158] sm:$0xff]
    %v1382 = vld [vmem:[#allocation7 + $0x160] sm:$0xff]
    %v1383 = vld [vmem:[#allocation7 + $0x168] sm:$0xff]
    %v1384 = vld [vmem:[#allocation7 + $0x170] sm:$0xff]
    %v1385 = vld [vmem:[#allocation7 + $0x178] sm:$0xff]
    %s1386 = scalar_lea.vmem %s6, 5
    %v1387 = vld [vmem:[%s1386] ss:$8 sm:$0x3]
    %v1389 = vlaneseq
    %v1390 = vshrl.u32 %v1389, 7
    %v1391 = vsub.s32 0, %v1390
    %v1392 = vrot.slane %v1387, %v1391
    %v1393 = vlaneseq
    %v1394 = vshrl.u32 %v1393, 7
    %v1395 = vsub.s32 1, %v1394
    %v1396 = vrot.slane %v1387, %v1395
    %v1447 = vunpack.c.l.b16 %v1338
    %v1448 = vunpack.c.h.b16 %v1338
    %v1449 = vunpack.c.l.b16 %v1339
    %v1450 = vunpack.c.h.b16 %v1339
    %v1451 = vunpack.c.l.b16 %v1340
    %v1452 = vunpack.c.h.b16 %v1340
    %v1453 = vunpack.c.l.b16 %v1341
    %v1454 = vunpack.c.h.b16 %v1341
    %v1455 = vunpack.c.l.b16 %v1342
    %v1456 = vunpack.c.h.b16 %v1342
    %v1457 = vunpack.c.l.b16 %v1343
    %v1458 = vunpack.c.h.b16 %v1343
    %v1459 = vunpack.c.l.b16 %v1344
    %v1460 = vunpack.c.h.b16 %v1344
    %v1461 = vunpack.c.l.b16 %v1345
    %v1462 = vunpack.c.h.b16 %v1345
    %v1463 = vunpack.c.l.b16 %v1346
    %v1464 = vunpack.c.h.b16 %v1346
    %v1465 = vunpack.c.l.b16 %v1347
    %v1466 = vunpack.c.h.b16 %v1347
    %v1467 = vunpack.c.l.b16 %v1348
    %v1468 = vunpack.c.h.b16 %v1348
    %v1469 = vunpack.c.l.b16 %v1349
    %v1470 = vunpack.c.h.b16 %v1349
    %v1471 = vunpack.c.l.b16 %v1350
    %v1472 = vunpack.c.h.b16 %v1350
    %v1473 = vunpack.c.l.b16 %v1351
    %v1474 = vunpack.c.h.b16 %v1351
    %v1475 = vunpack.c.l.b16 %v1352
    %v1476 = vunpack.c.h.b16 %v1352
    %v1477 = vunpack.c.l.b16 %v1353
    %v1478 = vunpack.c.h.b16 %v1353
    %v1479 = vunpack.c.l.b16 %v1354
    %v1480 = vunpack.c.h.b16 %v1354
    %v1481 = vunpack.c.l.b16 %v1355
    %v1482 = vunpack.c.h.b16 %v1355
    %v1483 = vunpack.c.l.b16 %v1356
    %v1484 = vunpack.c.h.b16 %v1356
    %v1485 = vunpack.c.l.b16 %v1357
    %v1486 = vunpack.c.h.b16 %v1357
    %v1487 = vunpack.c.l.b16 %v1358
    %v1488 = vunpack.c.h.b16 %v1358
    %v1489 = vunpack.c.l.b16 %v1359
    %v1490 = vunpack.c.h.b16 %v1359
    %v1491 = vunpack.c.l.b16 %v1360
    %v1492 = vunpack.c.h.b16 %v1360
    %v1493 = vunpack.c.l.b16 %v1361
    %v1494 = vunpack.c.h.b16 %v1361
    %v1495 = vunpack.c.l.b16 %v1362
    %v1496 = vunpack.c.h.b16 %v1362
    %v1497 = vunpack.c.l.b16 %v1363
    %v1498 = vunpack.c.h.b16 %v1363
    %v1499 = vunpack.c.l.b16 %v1364
    %v1500 = vunpack.c.h.b16 %v1364
    %v1501 = vunpack.c.l.b16 %v1365
    %v1502 = vunpack.c.h.b16 %v1365
    %v1503 = vunpack.c.l.b16 %v1366
    %v1504 = vunpack.c.h.b16 %v1366
    %v1505 = vunpack.c.l.b16 %v1367
    %v1506 = vunpack.c.h.b16 %v1367
    %v1507 = vunpack.c.l.b16 %v1368
    %v1508 = vunpack.c.h.b16 %v1368
    %v1509 = vunpack.c.l.b16 %v1369
    %v1510 = vunpack.c.h.b16 %v1369
    %v1511 = vunpack.c.l.b16 %v1370
    %v1512 = vunpack.c.h.b16 %v1370
    %v1513 = vunpack.c.l.b16 %v1371
    %v1514 = vunpack.c.h.b16 %v1371
    %v1515 = vunpack.c.l.b16 %v1372
    %v1516 = vunpack.c.h.b16 %v1372
    %v1517 = vunpack.c.l.b16 %v1373
    %v1518 = vunpack.c.h.b16 %v1373
    %v1519 = vunpack.c.l.b16 %v1374
    %v1520 = vunpack.c.h.b16 %v1374
    %v1521 = vunpack.c.l.b16 %v1375
    %v1522 = vunpack.c.h.b16 %v1375
    %v1523 = vunpack.c.l.b16 %v1376
    %v1524 = vunpack.c.h.b16 %v1376
    %v1525 = vunpack.c.l.b16 %v1377
    %v1526 = vunpack.c.h.b16 %v1377
    %v1527 = vunpack.c.l.b16 %v1378
    %v1528 = vunpack.c.h.b16 %v1378
    %v1529 = vunpack.c.l.b16 %v1379
    %v1530 = vunpack.c.h.b16 %v1379
    %v1531 = vunpack.c.l.b16 %v1380
    %v1532 = vunpack.c.h.b16 %v1380
    %v1533 = vunpack.c.l.b16 %v1381
    %v1534 = vunpack.c.h.b16 %v1381
    %v1535 = vunpack.c.l.b16 %v1382
    %v1536 = vunpack.c.h.b16 %v1382
    %v1537 = vunpack.c.l.b16 %v1383
    %v1538 = vunpack.c.h.b16 %v1383
    %v1539 = vunpack.c.l.b16 %v1384
    %v1540 = vunpack.c.h.b16 %v1384
    %v1541 = vunpack.c.l.b16 %v1385
    %v1542 = vunpack.c.h.b16 %v1385
    %v1543 = vpack.c.b16 %v1449, %v1447
    %v1544 = vpack.c.b16 %v1450, %v1448
    %v1545 = vpack.c.b16 %v1453, %v1451
    %v1546 = vpack.c.b16 %v1454, %v1452
    %v1547 = vpack.c.b16 %v1457, %v1455
    %v1548 = vpack.c.b16 %v1458, %v1456
    %v1549 = vpack.c.b16 %v1461, %v1459
    %v1550 = vpack.c.b16 %v1462, %v1460
    %v1551 = vpack.c.b16 %v1465, %v1463
    %v1552 = vpack.c.b16 %v1466, %v1464
    %v1553 = vpack.c.b16 %v1469, %v1467
    %v1554 = vpack.c.b16 %v1470, %v1468
    %v1555 = vpack.c.b16 %v1473, %v1471
    %v1556 = vpack.c.b16 %v1474, %v1472
    %v1557 = vpack.c.b16 %v1477, %v1475
    %v1558 = vpack.c.b16 %v1478, %v1476
    %v1559 = vpack.c.b16 %v1481, %v1479
    %v1560 = vpack.c.b16 %v1482, %v1480
    %v1561 = vpack.c.b16 %v1485, %v1483
    %v1562 = vpack.c.b16 %v1486, %v1484
    %v1563 = vpack.c.b16 %v1489, %v1487
    %v1564 = vpack.c.b16 %v1490, %v1488
    %v1565 = vpack.c.b16 %v1493, %v1491
    %v1566 = vpack.c.b16 %v1494, %v1492
    %v1567 = vpack.c.b16 %v1497, %v1495
    %v1568 = vpack.c.b16 %v1498, %v1496
    %v1569 = vpack.c.b16 %v1501, %v1499
    %v1570 = vpack.c.b16 %v1502, %v1500
    %v1571 = vpack.c.b16 %v1505, %v1503
    %v1572 = vpack.c.b16 %v1506, %v1504
    %v1573 = vpack.c.b16 %v1509, %v1507
    %v1574 = vpack.c.b16 %v1510, %v1508
    %v1575 = vpack.c.b16 %v1513, %v1511
    %v1576 = vpack.c.b16 %v1514, %v1512
    %v1577 = vpack.c.b16 %v1517, %v1515
    %v1578 = vpack.c.b16 %v1518, %v1516
    %v1579 = vpack.c.b16 %v1521, %v1519
    %v1580 = vpack.c.b16 %v1522, %v1520
    %v1581 = vpack.c.b16 %v1525, %v1523
    %v1582 = vpack.c.b16 %v1526, %v1524
    %v1583 = vpack.c.b16 %v1529, %v1527
    %v1584 = vpack.c.b16 %v1530, %v1528
    %v1585 = vpack.c.b16 %v1533, %v1531
    %v1586 = vpack.c.b16 %v1534, %v1532
    %v1587 = vpack.c.b16 %v1537, %v1535
    %v1588 = vpack.c.b16 %v1538, %v1536
    %v1589 = vpack.c.b16 %v1541, %v1539
    %v1590 = vpack.c.b16 %v1542, %v1540
    %1639 = vmatprep.subr.bf16.mxu0 %v1544
    %1640 = vmatpush1.bf16.msra.mxu0 %v1543
    %1641 = vmatprep.subr.bf16.mxu0 %v1546
    %1642 = vmatpush1.bf16.msra.mxu0 %v1545
    %1643 = vmatprep.subr.bf16.mxu0 %v1548
    %1644 = vmatpush1.bf16.msra.mxu0 %v1547
    %1645 = vmatprep.subr.bf16.mxu0 %v1550
    %1646 = vmatpush1.bf16.msra.mxu0 %v1549
    %1647 = vmatprep.subr.bf16.mxu0 %v1552
    %1648 = vmatpush1.bf16.msra.mxu0 %v1551
    %1649 = vmatprep.subr.bf16.mxu0 %v1554
    %1650 = vmatpush1.bf16.msra.mxu0 %v1553
    %1651 = vmatprep.subr.bf16.mxu0 %v1556
    %1652 = vmatpush1.bf16.msra.mxu0 %v1555
    %1653 = vmatprep.subr.bf16.mxu0 %v1558
    %1654 = vmatpush1.bf16.msra.mxu0 %v1557
    %1655 = vmatprep.subr.bf16.mxu0 %v1560
    %1656 = vmatpush1.bf16.msra.mxu0 %v1559
    %1657 = vmatprep.subr.bf16.mxu0 %v1562
    %1658 = vmatpush1.bf16.msra.mxu0 %v1561
    %1659 = vmatprep.subr.bf16.mxu0 %v1564
    %1660 = vmatpush1.bf16.msra.mxu0 %v1563
    %1661 = vmatprep.subr.bf16.mxu0 %v1566
    %1662 = vmatpush1.bf16.msra.mxu0 %v1565
    %1663 = vmatprep.subr.bf16.mxu0 %v1568
    %1664 = vmatpush1.bf16.msra.mxu0 %v1567
    %1665 = vmatprep.subr.bf16.mxu0 %v1570
    %1666 = vmatpush1.bf16.msra.mxu0 %v1569
    %1667 = vmatprep.subr.bf16.mxu0 %v1572
    %1668 = vmatpush1.bf16.msra.mxu0 %v1571
    %1669 = vmatprep.subr.bf16.mxu0 %v1574
    %1670 = vmatpush1.bf16.msra.mxu0 %v1573
    %1671 = vmatprep.mubr.bf16.mxu0 %v1336
    %1672 = vmatmul.mubr.bf16.gmra.mrb[0].mxu0 %v1335
    %v1673 = vpop.f32.mrb[0].mxu0
    %v1674 = vadd.f32 %v1392, %v1673
    %v1675 = vpop.f32.mrb[0].mxu0
    %v1676 = vadd.f32 %v1396, %v1675
    %v1677 = vpop.f32.mrb[0].mxu0
    %v1678 = vadd.f32 %v1392, %v1677
    %v1679 = vpop.f32.mrb[0].mxu0
    %v1680 = vadd.f32 %v1396, %v1679
    %1681 = vdwg.mxu0
    %1682 = vmatprep.subr.bf16.mxu0 %v1576
    %1683 = vmatpush1.bf16.msra.mxu0 %v1575
    %1684 = vmatprep.subr.bf16.mxu0 %v1578
    %1685 = vmatpush1.bf16.msra.mxu0 %v1577
    %1686 = vmatprep.subr.bf16.mxu0 %v1580
    %1687 = vmatpush1.bf16.msra.mxu0 %v1579
    %1688 = vmatprep.subr.bf16.mxu0 %v1582
    %1689 = vmatpush1.bf16.msra.mxu0 %v1581
    %1690 = vmatprep.subr.bf16.mxu0 %v1584
    %1691 = vmatpush1.bf16.msra.mxu0 %v1583
    %1692 = vmatprep.subr.bf16.mxu0 %v1586
    %1693 = vmatpush1.bf16.msra.mxu0 %v1585
    %1694 = vmatprep.subr.bf16.mxu0 %v1588
    %1695 = vmatpush1.bf16.msra.mxu0 %v1587
    %1696 = vmatprep.subr.bf16.mxu0 %v1590
    %1697 = vmatpush1.bf16.msra.mxu0 %v1589
    %1698 = vmatprep.subr.bf16.mxu0 0
    %1699 = vmatpush1.bf16.msra.mxu0 0
    %1700 = vmatprep.subr.bf16.mxu0 0
    %1701 = vmatpush1.bf16.msra.mxu0 0
    %1702 = vmatprep.subr.bf16.mxu0 0
    %1703 = vmatpush1.bf16.msra.mxu0 0
    %1704 = vmatprep.subr.bf16.mxu0 0
    %1705 = vmatpush1.bf16.msra.mxu0 0
    %1706 = vmatprep.subr.bf16.mxu0 0
    %1707 = vmatpush1.bf16.msra.mxu0 0
    %1708 = vmatprep.subr.bf16.mxu0 0
    %1709 = vmatpush1.bf16.msra.mxu0 0
    %1710 = vmatprep.subr.bf16.mxu0 0
    %1711 = vmatpush1.bf16.msra.mxu0 0
    %1712 = vmatprep.subr.bf16.mxu0 0
    %1713 = vmatpush1.bf16.msra.mxu0 0
    %1714 = vmatprep.mubr.bf16.mxu0 0
    %1715 = vmatmul.mubr.bf16.gmra.mrb[0].mxu0 %v1337
    %v1716 = vpop.f32.mrb[0].mxu0
    %v1717 = vadd.f32 %v1674, %v1716
    %v1718 = vpop.f32.mrb[0].mxu0
    %v1719 = vadd.f32 %v1676, %v1718
    %v1720 = vpop.f32.mrb[0].mxu0
    %v1721 = vadd.f32 %v1678, %v1720
    %v1722 = vpop.f32.mrb[0].mxu0
    %v1723 = vadd.f32 %v1680, %v1722
    %1724 = vdwg.mxu0
    %1725 = vst.msk [vmem:[%s7] sm:$0xff] %vm1066, %v983
    %1726 = vst.msk [vmem:[%s7 + $0x20] sm:$0xff] %vm1066, %v984
    %1727 = vst [vmem:[%s7 + $0x8] sm:$0xff] %v959
    %1728 = vst [vmem:[%s7 + $0x28] sm:$0xff] %v962
    %1729 = vst [vmem:[%s7 + $0x10] sm:$0xff] %v1717
    %1730 = vst [vmem:[%s7 + $0x18] sm:$0xff] %v1719
    %1731 = vst [vmem:[%s7 + $0x30] sm:$0xff] %v1721
    %1732 = vst [vmem:[%s7 + $0x38] sm:$0xff] %v1723
    // Predicated region
    $region46: #{fc_vae_abc_forward.1} parent=1 // pred_check
      _
    $region47: #{fc_vae_abc_forward.1} parent=1 // pred_check_branch
      %1734 = sbr.rel (0) target = $region49
    $region48: #{fc_vae_abc_forward.1} parent=1 // pred_region
      _
    $region49: #{fc_vae_abc_forward.1} parent=1 // pred_fallthru
      _
    // Predicated region
    $region50: #{fc_vae_abc_forward.1} parent=1 // pred_check
      _
    $region51: #{fc_vae_abc_forward.1} parent=1 // pred_check_branch
      %1736 = sbr.rel (0) target = $region53
    $region52: #{fc_vae_abc_forward.1} parent=1 // pred_region
      _
    $region53: #{fc_vae_abc_forward.1} parent=1 // pred_fallthru
      _
    %1737 = vsyncpa [#allocation3], 1
    %1738 = vsyncpa [#allocation5], 1
    %1739 = vsyncpa [#allocation8], 1

</llo_original>
